<compile_context>
chip_gen: v6e
topology: v6e:2x2x1
jax: 0.10.0
libtpu: 0.0.40
codegen_flags: <defaults>
</compile_context>

<pallas_src>
import functools

import jax
import jax.numpy as jnp
from jax.experimental import pallas as pl
from jax.experimental.pallas import tpu as pltpu


def _cross_attn_kernel(x_ref, low_ref, high_ref,
                       wq_ref, wk_ref, wv_ref, wo_ref, bias_ref,
                       out_ref, *, heads, dim_head):
    """One batch-element grid point; all heads fused.

    x_ref    : (1, Nq, D)     bf16
    low_ref  : (1, Nk, D)     bf16
    high_ref : (1, Nk, D)     bf16
    wq/wk/wv : (D, H*Dh)      bf16  (scale already folded into Wq)
    wo_ref   : (H*Dh, D)      bf16
    bias_ref : (1, D)         f32
    out_ref  : (1, Nq, D)     f32
    """
    x = x_ref[0]            # (Nq, D)
    low = low_ref[0]        # (Nk, D)
    high = high_ref[0]      # (Nk, D)
    wq = wq_ref[...]        # (D, H*Dh)
    wk = wk_ref[...]
    wv = wv_ref[...]
    wo = wo_ref[...]        # (H*Dh, D)
    bias = bias_ref[...]    # (1, D)

    # Fused projections for all heads (bf16 MXU operands, f32 accumulation).
    q = jnp.dot(x, wq, preferred_element_type=jnp.float32)     # (Nq, H*Dh) f32, pre-scaled
    k = jnp.dot(low, wk, preferred_element_type=jnp.float32)   # (Nk, H*Dh) f32
    v = jnp.dot(high, wv, preferred_element_type=jnp.float32)  # (Nk, H*Dh) f32

    # Per-head attention; H is small and static -> unrolled Python loop.
    outs = []
    for h in range(heads):
        sl = slice(h * dim_head, (h + 1) * dim_head)
        q_h = q[:, sl].astype(jnp.bfloat16)                    # (Nq, Dh)
        k_h = k[:, sl].astype(jnp.bfloat16)                    # (Nk, Dh)
        v_h = v[:, sl].astype(jnp.bfloat16)                    # (Nk, Dh)

        # sim = einsum('i d, j d -> i j', q_h, k_h)
        sim = jax.lax.dot_general(
            q_h, k_h, (((1,), (1,)), ((), ())),
            preferred_element_type=jnp.float32)                # (Nq, Nk) f32

        # Numerically-stable softmax over keys, all in f32.
        sim_max = jnp.max(sim, axis=-1, keepdims=True)
        p = jnp.exp(sim - sim_max)
        denom = jnp.sum(p, axis=-1, keepdims=True)
        p = p * pl.reciprocal(denom, approx=True)              # EUP vrcp

        # out_h = einsum('i j, j d -> i d', attn, v_h)
        out_h = jnp.dot(p.astype(jnp.bfloat16), v_h,
                        preferred_element_type=jnp.float32)    # (Nq, Dh) f32
        outs.append(out_h)

    # One output projection over the full inner dim (contraction = H*Dh).
    out_all = jnp.concatenate(outs, axis=-1)                   # (Nq, H*Dh) f32
    contrib = jnp.dot(out_all.astype(jnp.bfloat16), wo,
                      preferred_element_type=jnp.float32)      # (Nq, D) f32

    out_ref[0] = contrib + bias                                # bias added once


def cross_attention(x, low, high, wq, wk, wv, wo, wo_bias, *, heads, dim_head):
    """Pallas CrossAttention forward (eval semantics, no mask, dropout p=0).

    wq, wk, wv : (inner_dim, dim)  -- PyTorch nn.Linear weight layout (out, in)
    wo         : (dim, inner_dim)
    wo_bias    : (dim,)
    """
    B, Nq, D = x.shape
    _, Nk, _ = low.shape
    H, Dh = heads, dim_head
    HDh = H * Dh
    scale = float(Dh) ** (-0.5)

    # Weight prep (plain JAX glue): stacked, scale folded into Wq, cast to bf16.
    wq_s = (wq.T * scale).astype(jnp.bfloat16)   # (D, H*Dh)
    wk_s = wk.T.astype(jnp.bfloat16)             # (D, H*Dh)
    wv_s = wv.T.astype(jnp.bfloat16)             # (D, H*Dh)
    wo_s = wo.T.astype(jnp.bfloat16)             # (H*Dh, D)
    bias2d = wo_bias.reshape(1, D).astype(jnp.float32)

    x_b = x.astype(jnp.bfloat16)
    low_b = low.astype(jnp.bfloat16)
    high_b = high.astype(jnp.bfloat16)

    kernel = functools.partial(_cross_attn_kernel, heads=H, dim_head=Dh)

    return pl.pallas_call(
        kernel,
        out_shape=jax.ShapeDtypeStruct((B, Nq, D), jnp.float32),
        grid_spec=pltpu.PrefetchScalarGridSpec(
            num_scalar_prefetch=0,
            grid=(B,),
            in_specs=[
                pl.BlockSpec((1, Nq, D), lambda b: (b, 0, 0)),   # x
                pl.BlockSpec((1, Nk, D), lambda b: (b, 0, 0)),   # low
                pl.BlockSpec((1, Nk, D), lambda b: (b, 0, 0)),   # high
                pl.BlockSpec((D, HDh),   lambda b: (0, 0)),      # wq (stacked, scaled)
                pl.BlockSpec((D, HDh),   lambda b: (0, 0)),      # wk
                pl.BlockSpec((D, HDh),   lambda b: (0, 0)),      # wv
                pl.BlockSpec((HDh, D),   lambda b: (0, 0)),      # wo
                pl.BlockSpec((1, D),     lambda b: (0, 0)),      # bias
            ],
            out_specs=pl.BlockSpec((1, Nq, D), lambda b: (b, 0, 0)),
        ),
        compiler_params=pltpu.CompilerParams(
            dimension_semantics=("parallel",)),
    )(x_b, low_b, high_b, wq_s, wk_s, wv_s, wo_s, bias2d)


def cross_attention_ref(x, low, high, wq, wk, wv, wo, wo_bias, *, heads, dim_head):
    """Pure-JAX f32 reference matching the PyTorch module (eval, no mask)."""
    B, Nq, D = x.shape
    H, Dh = heads, dim_head
    scale = float(Dh) ** (-0.5)
    q = x @ wq.T
    k = low @ wk.T
    v = high @ wv.T

    def split(t):
        b, n, _ = t.shape
        return t.reshape(b, n, H, Dh).transpose(0, 2, 1, 3).reshape(b * H, n, Dh)

    q, k, v = map(split, (q, k, v))
    q = q * scale
    sim = jnp.einsum('bid,bjd->bij', q, k)
    a = jax.nn.softmax(sim, axis=-1)
    out = jnp.einsum('bij,bjd->bid', a, v)
    out = out.reshape(B, H, Nq, Dh).transpose(0, 2, 1, 3).reshape(B, Nq, H * Dh)
    return out @ wo.T + wo_bias


if __name__ == "__main__":
    # Small shapes consistent with the module.
    B, Nq, Nk = 2, 16, 8
    dim, heads, dim_head = 32, 4, 8
    inner_dim = heads * dim_head

    key = jax.random.PRNGKey(0)
    ks = jax.random.split(key, 8)
    x    = jax.random.normal(ks[0], (B, Nq, dim), dtype=jnp.float32)
    low  = jax.random.normal(ks[1], (B, Nk, dim), dtype=jnp.float32)
    high = jax.random.normal(ks[2], (B, Nk, dim), dtype=jnp.float32)

    # Deterministic parameters (nn.Linear weight layout: (out_features, in_features)).
    wq = 0.1 * jax.random.normal(ks[3], (inner_dim, dim), dtype=jnp.float32)
    wk = 0.1 * jax.random.normal(ks[4], (inner_dim, dim), dtype=jnp.float32)
    wv = 0.1 * jax.random.normal(ks[5], (inner_dim, dim), dtype=jnp.float32)
    wo = 0.1 * jax.random.normal(ks[6], (dim, inner_dim), dtype=jnp.float32)
    wo_bias = 0.01 * jax.random.normal(ks[7], (dim,), dtype=jnp.float32)

    out = cross_attention(x, low, high, wq, wk, wv, wo, wo_bias,
                          heads=heads, dim_head=dim_head)
    out = jax.block_until_ready(out)

    ref = cross_attention_ref(x, low, high, wq, wk, wv, wo, wo_bias,
                              heads=heads, dim_head=dim_head)
    # bf16 MXU operands + approx reciprocal -> loosened tolerance vs f32 reference.
    assert jnp.allclose(out, ref, atol=2e-2, rtol=2e-2), "mismatch vs reference"

    print("KERNEL_OK")
</pallas_src>

<mosaic_0001>
module attributes {stable_mosaic.version = 11 : i64} {
  func.func @_cross_attn_kernel(%arg0: i32, %arg1: memref<1x16x32xbf16, #tpu.memory_space<vmem>>, %arg2: memref<1x8x32xbf16, #tpu.memory_space<vmem>>, %arg3: memref<1x8x32xbf16, #tpu.memory_space<vmem>>, %arg4: memref<32x32xbf16, #tpu.memory_space<vmem>>, %arg5: memref<32x32xbf16, #tpu.memory_space<vmem>>, %arg6: memref<32x32xbf16, #tpu.memory_space<vmem>>, %arg7: memref<32x32xbf16, #tpu.memory_space<vmem>>, %arg8: memref<1x32xf32, #tpu.memory_space<vmem>>, %arg9: memref<1x16x32xf32, #tpu.memory_space<vmem>>) attributes {dimension_semantics = [#tpu.dimension_semantics<parallel>], iteration_bounds = array<i64: 2>, scalar_prefetch = 0 : i64, scratch_operands = 0 : i64, tpu.core_type = #tpu.core_type<tc>, window_params = [{transform_indices = @transform_0, window_bounds = array<i64: 1, 16, 32>}, {transform_indices = @transform_1, window_bounds = array<i64: 1, 8, 32>}, {transform_indices = @transform_2, window_bounds = array<i64: 1, 8, 32>}, {pipeline_mode = #tpu.pipeline_mode<synchronous>, transform_indices = @transform_3, window_bounds = array<i64: 32, 32>}, {pipeline_mode = #tpu.pipeline_mode<synchronous>, transform_indices = @transform_4, window_bounds = array<i64: 32, 32>}, {pipeline_mode = #tpu.pipeline_mode<synchronous>, transform_indices = @transform_5, window_bounds = array<i64: 32, 32>}, {pipeline_mode = #tpu.pipeline_mode<synchronous>, transform_indices = @transform_6, window_bounds = array<i64: 32, 32>}, {pipeline_mode = #tpu.pipeline_mode<synchronous>, transform_indices = @transform_7, window_bounds = array<i64: 1, 32>}, {transform_indices = @transform_8, window_bounds = array<i64: 1, 16, 32>}]} {
    %c0 = arith.constant 0 : index
    %c0_0 = arith.constant 0 : index
    %c0_1 = arith.constant 0 : index
    %0 = vector.load %arg1[%c0, %c0_0, %c0_1] : memref<1x16x32xbf16, #tpu.memory_space<vmem>>, vector<1x16x32xbf16>
    %1 = vector.shape_cast %0 : vector<1x16x32xbf16> to vector<16x32xbf16>
    %c0_2 = arith.constant 0 : index
    %c0_3 = arith.constant 0 : index
    %c0_4 = arith.constant 0 : index
    %2 = vector.load %arg2[%c0_2, %c0_3, %c0_4] : memref<1x8x32xbf16, #tpu.memory_space<vmem>>, vector<1x8x32xbf16>
    %3 = vector.shape_cast %2 : vector<1x8x32xbf16> to vector<8x32xbf16>
    %c0_5 = arith.constant 0 : index
    %c0_6 = arith.constant 0 : index
    %c0_7 = arith.constant 0 : index
    %4 = vector.load %arg3[%c0_5, %c0_6, %c0_7] : memref<1x8x32xbf16, #tpu.memory_space<vmem>>, vector<1x8x32xbf16>
    %5 = vector.shape_cast %4 : vector<1x8x32xbf16> to vector<8x32xbf16>
    %c0_8 = arith.constant 0 : index
    %c0_9 = arith.constant 0 : index
    %6 = vector.load %arg4[%c0_8, %c0_9] : memref<32x32xbf16, #tpu.memory_space<vmem>>, vector<32x32xbf16>
    %c0_10 = arith.constant 0 : index
    %c0_11 = arith.constant 0 : index
    %7 = vector.load %arg5[%c0_10, %c0_11] : memref<32x32xbf16, #tpu.memory_space<vmem>>, vector<32x32xbf16>
    %c0_12 = arith.constant 0 : index
    %c0_13 = arith.constant 0 : index
    %8 = vector.load %arg6[%c0_12, %c0_13] : memref<32x32xbf16, #tpu.memory_space<vmem>>, vector<32x32xbf16>
    %c0_14 = arith.constant 0 : index
    %c0_15 = arith.constant 0 : index
    %9 = vector.load %arg7[%c0_14, %c0_15] : memref<32x32xbf16, #tpu.memory_space<vmem>>, vector<32x32xbf16>
    %c0_16 = arith.constant 0 : index
    %c0_17 = arith.constant 0 : index
    %10 = vector.load %arg8[%c0_16, %c0_17] : memref<1x32xf32, #tpu.memory_space<vmem>>, vector<1x32xf32>
    %cst = arith.constant dense<0.000000e+00> : vector<16x32xf32>
    %11 = tpu.matmul %1, %6, %cst {dimension_numbers = #tpu.dot_dimension_numbers<[1], [0], [0], [1], [0, 0, 1, 1], [], []>} : vector<16x32xbf16>, vector<32x32xbf16>, vector<16x32xf32> -> vector<16x32xf32>
    %cst_18 = arith.constant dense<0.000000e+00> : vector<8x32xf32>
    %12 = tpu.matmul %3, %7, %cst_18 {dimension_numbers = #tpu.dot_dimension_numbers<[1], [0], [0], [1], [0, 0, 1, 1], [], []>} : vector<8x32xbf16>, vector<32x32xbf16>, vector<8x32xf32> -> vector<8x32xf32>
    %cst_19 = arith.constant dense<0.000000e+00> : vector<8x32xf32>
    %13 = tpu.matmul %5, %8, %cst_19 {dimension_numbers = #tpu.dot_dimension_numbers<[1], [0], [0], [1], [0, 0, 1, 1], [], []>} : vector<8x32xbf16>, vector<32x32xbf16>, vector<8x32xf32> -> vector<8x32xf32>
    %14 = vector.extract_strided_slice %11 {offsets = [0, 0], sizes = [16, 8], strides = [1, 1]} : vector<16x32xf32> to vector<16x8xf32>
    %15 = arith.truncf %14 : vector<16x8xf32> to vector<16x8xbf16>
    %16 = vector.extract_strided_slice %12 {offsets = [0, 0], sizes = [8, 8], strides = [1, 1]} : vector<8x32xf32> to vector<8x8xf32>
    %17 = arith.truncf %16 : vector<8x8xf32> to vector<8x8xbf16>
    %18 = vector.extract_strided_slice %13 {offsets = [0, 0], sizes = [8, 8], strides = [1, 1]} : vector<8x32xf32> to vector<8x8xf32>
    %19 = arith.truncf %18 : vector<8x8xf32> to vector<8x8xbf16>
    %cst_20 = arith.constant dense<0.000000e+00> : vector<16x8xf32>
    %20 = tpu.matmul %15, %17, %cst_20 {dimension_numbers = #tpu.dot_dimension_numbers<[1], [1], [0], [0], [0, 0, 1, 0], [], []>} : vector<16x8xbf16>, vector<8x8xbf16>, vector<16x8xf32> -> vector<16x8xf32>
    %cst_21 = arith.constant dense<0xFF800000> : vector<16xf32>
    %21 = vector.multi_reduction <maximumf>, %20, %cst_21 [1] : vector<16x8xf32> to vector<16xf32>
    %22 = vector.shape_cast %21 : vector<16xf32> to vector<16x1xf32>
    %23 = vector.broadcast %22 : vector<16x1xf32> to vector<16x8xf32>
    %24 = arith.subf %20, %23 : vector<16x8xf32>
    %25 = math.exp %24 : vector<16x8xf32>
    %cst_22 = arith.constant dense<0.000000e+00> : vector<16xf32>
    %26 = vector.multi_reduction <add>, %25, %cst_22 [1] : vector<16x8xf32> to vector<16xf32>
    %27 = vector.shape_cast %26 : vector<16xf32> to vector<16x1xf32>
    %28 = tpu.reciprocal %27 {approx = true} : vector<16x1xf32> -> vector<16x1xf32>
    %29 = vector.broadcast %28 : vector<16x1xf32> to vector<16x8xf32>
    %30 = arith.mulf %25, %29 : vector<16x8xf32>
    %31 = arith.truncf %30 : vector<16x8xf32> to vector<16x8xbf16>
    %cst_23 = arith.constant dense<0.000000e+00> : vector<16x8xf32>
    %32 = tpu.matmul %31, %19, %cst_23 {dimension_numbers = #tpu.dot_dimension_numbers<[1], [0], [0], [1], [0, 0, 1, 1], [], []>} : vector<16x8xbf16>, vector<8x8xbf16>, vector<16x8xf32> -> vector<16x8xf32>
    %33 = vector.extract_strided_slice %11 {offsets = [0, 8], sizes = [16, 8], strides = [1, 1]} : vector<16x32xf32> to vector<16x8xf32>
    %34 = arith.truncf %33 : vector<16x8xf32> to vector<16x8xbf16>
    %35 = vector.extract_strided_slice %12 {offsets = [0, 8], sizes = [8, 8], strides = [1, 1]} : vector<8x32xf32> to vector<8x8xf32>
    %36 = arith.truncf %35 : vector<8x8xf32> to vector<8x8xbf16>
    %37 = vector.extract_strided_slice %13 {offsets = [0, 8], sizes = [8, 8], strides = [1, 1]} : vector<8x32xf32> to vector<8x8xf32>
    %38 = arith.truncf %37 : vector<8x8xf32> to vector<8x8xbf16>
    %cst_24 = arith.constant dense<0.000000e+00> : vector<16x8xf32>
    %39 = tpu.matmul %34, %36, %cst_24 {dimension_numbers = #tpu.dot_dimension_numbers<[1], [1], [0], [0], [0, 0, 1, 0], [], []>} : vector<16x8xbf16>, vector<8x8xbf16>, vector<16x8xf32> -> vector<16x8xf32>
    %cst_25 = arith.constant dense<0xFF800000> : vector<16xf32>
    %40 = vector.multi_reduction <maximumf>, %39, %cst_25 [1] : vector<16x8xf32> to vector<16xf32>
    %41 = vector.shape_cast %40 : vector<16xf32> to vector<16x1xf32>
    %42 = vector.broadcast %41 : vector<16x1xf32> to vector<16x8xf32>
    %43 = arith.subf %39, %42 : vector<16x8xf32>
    %44 = math.exp %43 : vector<16x8xf32>
    %cst_26 = arith.constant dense<0.000000e+00> : vector<16xf32>
    %45 = vector.multi_reduction <add>, %44, %cst_26 [1] : vector<16x8xf32> to vector<16xf32>
    %46 = vector.shape_cast %45 : vector<16xf32> to vector<16x1xf32>
    %47 = tpu.reciprocal %46 {approx = true} : vector<16x1xf32> -> vector<16x1xf32>
    %48 = vector.broadcast %47 : vector<16x1xf32> to vector<16x8xf32>
    %49 = arith.mulf %44, %48 : vector<16x8xf32>
    %50 = arith.truncf %49 : vector<16x8xf32> to vector<16x8xbf16>
    %cst_27 = arith.constant dense<0.000000e+00> : vector<16x8xf32>
    %51 = tpu.matmul %50, %38, %cst_27 {dimension_numbers = #tpu.dot_dimension_numbers<[1], [0], [0], [1], [0, 0, 1, 1], [], []>} : vector<16x8xbf16>, vector<8x8xbf16>, vector<16x8xf32> -> vector<16x8xf32>
    %52 = vector.extract_strided_slice %11 {offsets = [0, 16], sizes = [16, 8], strides = [1, 1]} : vector<16x32xf32> to vector<16x8xf32>
    %53 = arith.truncf %52 : vector<16x8xf32> to vector<16x8xbf16>
    %54 = vector.extract_strided_slice %12 {offsets = [0, 16], sizes = [8, 8], strides = [1, 1]} : vector<8x32xf32> to vector<8x8xf32>
    %55 = arith.truncf %54 : vector<8x8xf32> to vector<8x8xbf16>
    %56 = vector.extract_strided_slice %13 {offsets = [0, 16], sizes = [8, 8], strides = [1, 1]} : vector<8x32xf32> to vector<8x8xf32>
    %57 = arith.truncf %56 : vector<8x8xf32> to vector<8x8xbf16>
    %cst_28 = arith.constant dense<0.000000e+00> : vector<16x8xf32>
    %58 = tpu.matmul %53, %55, %cst_28 {dimension_numbers = #tpu.dot_dimension_numbers<[1], [1], [0], [0], [0, 0, 1, 0], [], []>} : vector<16x8xbf16>, vector<8x8xbf16>, vector<16x8xf32> -> vector<16x8xf32>
    %cst_29 = arith.constant dense<0xFF800000> : vector<16xf32>
    %59 = vector.multi_reduction <maximumf>, %58, %cst_29 [1] : vector<16x8xf32> to vector<16xf32>
    %60 = vector.shape_cast %59 : vector<16xf32> to vector<16x1xf32>
    %61 = vector.broadcast %60 : vector<16x1xf32> to vector<16x8xf32>
    %62 = arith.subf %58, %61 : vector<16x8xf32>
    %63 = math.exp %62 : vector<16x8xf32>
    %cst_30 = arith.constant dense<0.000000e+00> : vector<16xf32>
    %64 = vector.multi_reduction <add>, %63, %cst_30 [1] : vector<16x8xf32> to vector<16xf32>
    %65 = vector.shape_cast %64 : vector<16xf32> to vector<16x1xf32>
    %66 = tpu.reciprocal %65 {approx = true} : vector<16x1xf32> -> vector<16x1xf32>
    %67 = vector.broadcast %66 : vector<16x1xf32> to vector<16x8xf32>
    %68 = arith.mulf %63, %67 : vector<16x8xf32>
    %69 = arith.truncf %68 : vector<16x8xf32> to vector<16x8xbf16>
    %cst_31 = arith.constant dense<0.000000e+00> : vector<16x8xf32>
    %70 = tpu.matmul %69, %57, %cst_31 {dimension_numbers = #tpu.dot_dimension_numbers<[1], [0], [0], [1], [0, 0, 1, 1], [], []>} : vector<16x8xbf16>, vector<8x8xbf16>, vector<16x8xf32> -> vector<16x8xf32>
    %71 = vector.extract_strided_slice %11 {offsets = [0, 24], sizes = [16, 8], strides = [1, 1]} : vector<16x32xf32> to vector<16x8xf32>
    %72 = arith.truncf %71 : vector<16x8xf32> to vector<16x8xbf16>
    %73 = vector.extract_strided_slice %12 {offsets = [0, 24], sizes = [8, 8], strides = [1, 1]} : vector<8x32xf32> to vector<8x8xf32>
    %74 = arith.truncf %73 : vector<8x8xf32> to vector<8x8xbf16>
    %75 = vector.extract_strided_slice %13 {offsets = [0, 24], sizes = [8, 8], strides = [1, 1]} : vector<8x32xf32> to vector<8x8xf32>
    %76 = arith.truncf %75 : vector<8x8xf32> to vector<8x8xbf16>
    %cst_32 = arith.constant dense<0.000000e+00> : vector<16x8xf32>
    %77 = tpu.matmul %72, %74, %cst_32 {dimension_numbers = #tpu.dot_dimension_numbers<[1], [1], [0], [0], [0, 0, 1, 0], [], []>} : vector<16x8xbf16>, vector<8x8xbf16>, vector<16x8xf32> -> vector<16x8xf32>
    %cst_33 = arith.constant dense<0xFF800000> : vector<16xf32>
    %78 = vector.multi_reduction <maximumf>, %77, %cst_33 [1] : vector<16x8xf32> to vector<16xf32>
    %79 = vector.shape_cast %78 : vector<16xf32> to vector<16x1xf32>
    %80 = vector.broadcast %79 : vector<16x1xf32> to vector<16x8xf32>
    %81 = arith.subf %77, %80 : vector<16x8xf32>
    %82 = math.exp %81 : vector<16x8xf32>
    %cst_34 = arith.constant dense<0.000000e+00> : vector<16xf32>
    %83 = vector.multi_reduction <add>, %82, %cst_34 [1] : vector<16x8xf32> to vector<16xf32>
    %84 = vector.shape_cast %83 : vector<16xf32> to vector<16x1xf32>
    %85 = tpu.reciprocal %84 {approx = true} : vector<16x1xf32> -> vector<16x1xf32>
    %86 = vector.broadcast %85 : vector<16x1xf32> to vector<16x8xf32>
    %87 = arith.mulf %82, %86 : vector<16x8xf32>
    %88 = arith.truncf %87 : vector<16x8xf32> to vector<16x8xbf16>
    %cst_35 = arith.constant dense<0.000000e+00> : vector<16x8xf32>
    %89 = tpu.matmul %88, %76, %cst_35 {dimension_numbers = #tpu.dot_dimension_numbers<[1], [0], [0], [1], [0, 0, 1, 1], [], []>} : vector<16x8xbf16>, vector<8x8xbf16>, vector<16x8xf32> -> vector<16x8xf32>
    %90 = tpu.concatenate %32, %51, %70, %89 in 1 : vector<16x8xf32>, vector<16x8xf32>, vector<16x8xf32>, vector<16x8xf32> -> vector<16x32xf32>
    %91 = arith.truncf %90 : vector<16x32xf32> to vector<16x32xbf16>
    %cst_36 = arith.constant dense<0.000000e+00> : vector<16x32xf32>
    %92 = tpu.matmul %91, %9, %cst_36 {dimension_numbers = #tpu.dot_dimension_numbers<[1], [0], [0], [1], [0, 0, 1, 1], [], []>} : vector<16x32xbf16>, vector<32x32xbf16>, vector<16x32xf32> -> vector<16x32xf32>
    %93 = vector.broadcast %10 : vector<1x32xf32> to vector<16x32xf32>
    %94 = arith.addf %92, %93 : vector<16x32xf32>
    %c0_37 = arith.constant 0 : index
    %c0_38 = arith.constant 0 : index
    %c0_39 = arith.constant 0 : index
    %95 = vector.load %arg9[%c0_37, %c0_38, %c0_39] : memref<1x16x32xf32, #tpu.memory_space<vmem>>, vector<1x16x32xf32>
    %96 = vector.shape_cast %95 : vector<1x16x32xf32> to vector<16x32xf32>
    %97 = vector.shape_cast %94 : vector<16x32xf32> to vector<1x16x32xf32>
    tpu.vector_store %arg9[%c0_37, %c0_38, %c0_39], %97 {strides = array<i32>} : memref<1x16x32xf32, #tpu.memory_space<vmem>>, vector<1x16x32xf32>,
    return
  }
  func.func @transform_0(%arg0: i32) -> (i32, i32, i32) {
    %c0_i32 = arith.constant 0 : i32
    %c0_i32_0 = arith.constant 0 : i32
    %c0_i32_1 = arith.constant 0 : i32
    return %arg0, %c0_i32, %c0_i32_0 : i32, i32, i32
  }
  func.func @transform_1(%arg0: i32) -> (i32, i32, i32) {
    %c0_i32 = arith.constant 0 : i32
    %c0_i32_0 = arith.constant 0 : i32
    %c0_i32_1 = arith.constant 0 : i32
    return %arg0, %c0_i32, %c0_i32_0 : i32, i32, i32
  }
  func.func @transform_2(%arg0: i32) -> (i32, i32, i32) {
    %c0_i32 = arith.constant 0 : i32
    %c0_i32_0 = arith.constant 0 : i32
    %c0_i32_1 = arith.constant 0 : i32
    return %arg0, %c0_i32, %c0_i32_0 : i32, i32, i32
  }
  func.func @transform_3(%arg0: i32) -> (i32, i32) {
    %c0_i32 = arith.constant 0 : i32
    %c0_i32_0 = arith.constant 0 : i32
    %c0_i32_1 = arith.constant 0 : i32
    return %c0_i32, %c0_i32_0 : i32, i32
  }
  func.func @transform_4(%arg0: i32) -> (i32, i32) {
    %c0_i32 = arith.constant 0 : i32
    %c0_i32_0 = arith.constant 0 : i32
    %c0_i32_1 = arith.constant 0 : i32
    return %c0_i32, %c0_i32_0 : i32, i32
  }
  func.func @transform_5(%arg0: i32) -> (i32, i32) {
    %c0_i32 = arith.constant 0 : i32
    %c0_i32_0 = arith.constant 0 : i32
    %c0_i32_1 = arith.constant 0 : i32
    return %c0_i32, %c0_i32_0 : i32, i32
  }
  func.func @transform_6(%arg0: i32) -> (i32, i32) {
    %c0_i32 = arith.constant 0 : i32
    %c0_i32_0 = arith.constant 0 : i32
    %c0_i32_1 = arith.constant 0 : i32
    return %c0_i32, %c0_i32_0 : i32, i32
  }
  func.func @transform_7(%arg0: i32) -> (i32, i32) {
    %c0_i32 = arith.constant 0 : i32
    %c0_i32_0 = arith.constant 0 : i32
    %c0_i32_1 = arith.constant 0 : i32
    return %c0_i32, %c0_i32_0 : i32, i32
  }
  func.func @transform_8(%arg0: i32) -> (i32, i32, i32) {
    %c0_i32 = arith.constant 0 : i32
    %c0_i32_0 = arith.constant 0 : i32
    %c0_i32_1 = arith.constant 0 : i32
    return %arg0, %c0_i32, %c0_i32_0 : i32, i32, i32
  }
}

</mosaic_0001>

<llo_original>
// kernel: tpu_custom_call.1
$region0: #{tpu_custom_call.1}
  #allocation0 [shape = 'u32[]', space=smem, size = 0x4, offset = 0x4, fixed_abs, tag = 'smem constant byte address 0x4 - core index']
  #allocation1 [shape = 'u32[144,128]{1,0:T(1,128)}', space=vmem, size = 0x12000, scoped, tag = 'internal scratch']
  %s0 = inlined_call_operand.hbm [shape: bf16[2,16,32], index: 0, kind: input, shape index: {}]
  %s1 = inlined_call_operand.hbm [shape: bf16[2,8,32], index: 1, kind: input, shape index: {}]
  %s2 = inlined_call_operand.hbm [shape: bf16[2,8,32], index: 2, kind: input, shape index: {}]
  %s3 = inlined_call_operand.hbm [shape: bf16[32,32], index: 3, kind: input, shape index: {}]
  %s4 = inlined_call_operand.hbm [shape: bf16[32,32], index: 4, kind: input, shape index: {}]
  %s5 = inlined_call_operand.hbm [shape: bf16[32,32], index: 5, kind: input, shape index: {}]
  %s6 = inlined_call_operand.hbm [shape: bf16[32,32], index: 6, kind: input, shape index: {}]
  %s7 = inlined_call_operand.vmem [shape: f32[1,32], index: 7, kind: input, shape index: {}]
  %s8 = inlined_call_operand.hbm [shape: f32[2,16,32], index: 8, kind: output, shape index: {}]
  %s9 = sld [smem:[#allocation0]]
  $region93: #{tpu_custom_call.1} parent=0
    _
  %s11 = ssub.s32 1, %s9
  %s12 = scalar_select 0, %s11, %s9
  $region1: #{tpu_custom_call.1} parent=0
    #allocation2 [shape = 'u8[8192]{0}', space=vmem, size = 0x2000, scoped, tag = 'input window, operand 0']
    #allocation3 [shape = 's32[2]{0}', space=sflag, size = 0x8, scoped, tag = 'scoped memory for tpu_custom_call.1']
    #allocation4 [shape = 's32[2]{0}', space=sflag, size = 0x8, scoped, tag = 'scoped memory for tpu_custom_call.1']
    #allocation5 [shape = 'u8[4096]{0}', space=vmem, size = 0x1000, scoped, tag = 'input window, operand 1']
    #allocation6 [shape = 's32[2]{0}', space=sflag, size = 0x8, scoped, tag = 'scoped memory for tpu_custom_call.1']
    #allocation7 [shape = 'u8[4096]{0}', space=vmem, size = 0x1000, scoped, tag = 'input window, operand 2']
    #allocation8 [shape = 'u8[8192]{0}', space=vmem, size = 0x2000, scoped, tag = 'input window, operand 3, single buffered']
    #allocation9 [shape = 's32[1]{0}', space=sflag, size = 0x4, scoped, tag = 'scoped memory for tpu_custom_call.1']
    #allocation10 [shape = 'u8[8192]{0}', space=vmem, size = 0x2000, scoped, tag = 'input window, operand 4, single buffered']
    #allocation11 [shape = 'u8[8192]{0}', space=vmem, size = 0x2000, scoped, tag = 'input window, operand 5, single buffered']
    #allocation12 [shape = 's32[1]{0}', space=sflag, size = 0x4, scoped, tag = 'scoped memory for tpu_custom_call.1']
    #allocation13 [shape = 'u8[8192]{0}', space=vmem, size = 0x2000, scoped, tag = 'input window, operand 6, single buffered']
    #allocation14 [shape = 'u8[16384]{0}', space=vmem, size = 0x4000, scoped, tag = 'output window, operand 0']
    %13 = vsyncpa [#allocation3], 0
    %s14 = scalar_lea.sflag [#allocation3], 1
    %15 = vsyncpa %s14, 0
    %16 = vsyncpa [#allocation6], 0
    %s17 = scalar_lea.sflag [#allocation6], 1
    %18 = vsyncpa %s17, 0
    %19 = vsyncpa [#allocation9], 0
    %20 = vsyncpa [#allocation12], 0
    %21 = vsyncpa [#allocation4], 0
    %s22 = scalar_lea.sflag [#allocation4], 1
    %23 = vsyncpa %s22, 0
    loop: start=0, step=1, limit=4
    $region2: #{tpu_custom_call.1} parent=1 // loop_pre_header
      _
    $region3: #{tpu_custom_call.1} parent=1 // loop_header
      %s25 = sphi 0, %s29
      %p26 = scmp.ge.s32.totalorder %s25, 4
      %s35 = sphi 0, %s37
      %s38 = sphi 0, %s35
      %s39 = sphi 0, %s38
      %s55 = sphi 0, %s39
      %s61 = sphi 0, %s63
      %s64 = sphi 0, %s61
      %s65 = sphi 0, %s64
      %s81 = sphi 0, %s65
      %s87 = sphi 0, %s89
      %s90 = sphi 0, %s87
      %s91 = sphi 0, %s90
      %s107 = sphi 0, %s91
      %s111 = sphi 0, %s111
      %s113 = sphi 0, %s111
      %s114 = sphi 0, %s113
      %s128 = sphi 0, %s114
      %s132 = sphi 0, %s132
      %s134 = sphi 0, %s132
      %s135 = sphi 0, %s134
      %s149 = sphi 0, %s135
      %s153 = sphi 0, %s153
      %s155 = sphi 0, %s153
      %s156 = sphi 0, %s155
      %s170 = sphi 0, %s156
      %s174 = sphi 0, %s174
      %s176 = sphi 0, %s174
      %s177 = sphi 0, %s176
      %s191 = sphi 0, %s177
      %s195 = sphi 0, %s195
      %s197 = sphi 0, %s195
      %s198 = sphi 0, %s197
      %s212 = sphi 0, %s198
      %s218 = sphi 0, %s220
      %s221 = sphi 0, %s218
      %s222 = sphi 0, %s221
      %s238 = sphi 0, %s222
    $region4: #{tpu_custom_call.1} parent=1 // loop_header_branch
      %28 = sbr.rel (%p26) target = $region8
    $region5: #{tpu_custom_call.1} parent=1 // loop_body
      %s30 = ssub.s32 %s25, 1
      %s31 = ssub.s32 %s25, 2
      %s32 = sadd.s32 %s25, 1
      %s33 = ssub.s32 %s25, %s32
      %p34 = scmp.eq.s32.totalorder %s33, 0
      %s36 = sadd.s32 %s35, 1
      %s37 = scalar_select %p34, %s35, %s36
      %p40 = pneg %p34
      %p41 = scmp.eq.s32.totalorder %s25, 1
      %p42 = por %p40, %p41
      %p43 = scmp.ne.s32.totalorder %s35, %s38
      %p44 = scmp.eq.s32.totalorder %s25, 0
      %p45 = por %p43, %p44
      %p46 = scmp.ne.s32.totalorder %s35, %s38
      %p47 = scmp.eq.s32.totalorder %s30, 1
      %p48 = por %p46, %p47
      %p49 = scmp.ne.s32.totalorder %s38, %s39
      %p50 = scmp.eq.s32.totalorder %s30, 0
      %p51 = por %p49, %p50
      %p52 = scmp.ne.s32.totalorder %s38, %s39
      %p53 = scmp.eq.s32.totalorder %s31, 1
      %p54 = por %p52, %p53
      %p56 = scmp.ne.s32.totalorder %s39, %s55
      %p57 = scmp.eq.s32.totalorder %s31, 0
      %p58 = por %p56, %p57
      %s59 = ssub.s32 %s25, %s32
      %p60 = scmp.eq.s32.totalorder %s59, 0
      %s62 = sadd.s32 %s61, 1
      %s63 = scalar_select %p60, %s61, %s62
      %p66 = pneg %p60
      %p67 = scmp.eq.s32.totalorder %s25, 1
      %p68 = por %p66, %p67
      %p69 = scmp.ne.s32.totalorder %s61, %s64
      %p70 = scmp.eq.s32.totalorder %s25, 0
      %p71 = por %p69, %p70
      %p72 = scmp.ne.s32.totalorder %s61, %s64
      %p73 = scmp.eq.s32.totalorder %s30, 1
      %p74 = por %p72, %p73
      %p75 = scmp.ne.s32.totalorder %s64, %s65
      %p76 = scmp.eq.s32.totalorder %s30, 0
      %p77 = por %p75, %p76
      %p78 = scmp.ne.s32.totalorder %s64, %s65
      %p79 = scmp.eq.s32.totalorder %s31, 1
      %p80 = por %p78, %p79
      %p82 = scmp.ne.s32.totalorder %s65, %s81
      %p83 = scmp.eq.s32.totalorder %s31, 0
      %p84 = por %p82, %p83
      %s85 = ssub.s32 %s25, %s32
      %p86 = scmp.eq.s32.totalorder %s85, 0
      %s88 = sadd.s32 %s87, 1
      %s89 = scalar_select %p86, %s87, %s88
      %p92 = pneg %p86
      %p93 = scmp.eq.s32.totalorder %s25, 1
      %p94 = por %p92, %p93
      %p95 = scmp.ne.s32.totalorder %s87, %s90
      %p96 = scmp.eq.s32.totalorder %s25, 0
      %p97 = por %p95, %p96
      %p98 = scmp.ne.s32.totalorder %s87, %s90
      %p99 = scmp.eq.s32.totalorder %s30, 1
      %p100 = por %p98, %p99
      %p101 = scmp.ne.s32.totalorder %s90, %s91
      %p102 = scmp.eq.s32.totalorder %s30, 0
      %p103 = por %p101, %p102
      %p104 = scmp.ne.s32.totalorder %s90, %s91
      %p105 = scmp.eq.s32.totalorder %s31, 1
      %p106 = por %p104, %p105
      %p108 = scmp.ne.s32.totalorder %s91, %s107
      %p109 = scmp.eq.s32.totalorder %s31, 0
      %p110 = por %p108, %p109
      %s112 = sadd.s32 %s111, 1
      %p115 = scmp.eq.s32.totalorder %s25, 1
      %p116 = scmp.ne.s32.totalorder %s111, %s113
      %p117 = scmp.eq.s32.totalorder %s25, 0
      %p118 = por %p116, %p117
      %p119 = scmp.ne.s32.totalorder %s111, %s113
      %p120 = scmp.eq.s32.totalorder %s30, 1
      %p121 = por %p119, %p120
      %p122 = scmp.ne.s32.totalorder %s113, %s114
      %p123 = scmp.eq.s32.totalorder %s30, 0
      %p124 = por %p122, %p123
      %p125 = scmp.ne.s32.totalorder %s113, %s114
      %p126 = scmp.eq.s32.totalorder %s31, 1
      %p127 = por %p125, %p126
      %p129 = scmp.ne.s32.totalorder %s114, %s128
      %p130 = scmp.eq.s32.totalorder %s31, 0
      %p131 = por %p129, %p130
      %s133 = sadd.s32 %s132, 1
      %p136 = scmp.eq.s32.totalorder %s25, 1
      %p137 = scmp.ne.s32.totalorder %s132, %s134
      %p138 = scmp.eq.s32.totalorder %s25, 0
      %p139 = por %p137, %p138
      %p140 = scmp.ne.s32.totalorder %s132, %s134
      %p141 = scmp.eq.s32.totalorder %s30, 1
      %p142 = por %p140, %p141
      %p143 = scmp.ne.s32.totalorder %s134, %s135
      %p144 = scmp.eq.s32.totalorder %s30, 0
      %p145 = por %p143, %p144
      %p146 = scmp.ne.s32.totalorder %s134, %s135
      %p147 = scmp.eq.s32.totalorder %s31, 1
      %p148 = por %p146, %p147
      %p150 = scmp.ne.s32.totalorder %s135, %s149
      %p151 = scmp.eq.s32.totalorder %s31, 0
      %p152 = por %p150, %p151
      %s154 = sadd.s32 %s153, 1
      %p157 = scmp.eq.s32.totalorder %s25, 1
      %p158 = scmp.ne.s32.totalorder %s153, %s155
      %p159 = scmp.eq.s32.totalorder %s25, 0
      %p160 = por %p158, %p159
      %p161 = scmp.ne.s32.totalorder %s153, %s155
      %p162 = scmp.eq.s32.totalorder %s30, 1
      %p163 = por %p161, %p162
      %p164 = scmp.ne.s32.totalorder %s155, %s156
      %p165 = scmp.eq.s32.totalorder %s30, 0
      %p166 = por %p164, %p165
      %p167 = scmp.ne.s32.totalorder %s155, %s156
      %p168 = scmp.eq.s32.totalorder %s31, 1
      %p169 = por %p167, %p168
      %p171 = scmp.ne.s32.totalorder %s156, %s170
      %p172 = scmp.eq.s32.totalorder %s31, 0
      %p173 = por %p171, %p172
      %s175 = sadd.s32 %s174, 1
      %p178 = scmp.eq.s32.totalorder %s25, 1
      %p179 = scmp.ne.s32.totalorder %s174, %s176
      %p180 = scmp.eq.s32.totalorder %s25, 0
      %p181 = por %p179, %p180
      %p182 = scmp.ne.s32.totalorder %s174, %s176
      %p183 = scmp.eq.s32.totalorder %s30, 1
      %p184 = por %p182, %p183
      %p185 = scmp.ne.s32.totalorder %s176, %s177
      %p186 = scmp.eq.s32.totalorder %s30, 0
      %p187 = por %p185, %p186
      %p188 = scmp.ne.s32.totalorder %s176, %s177
      %p189 = scmp.eq.s32.totalorder %s31, 1
      %p190 = por %p188, %p189
      %p192 = scmp.ne.s32.totalorder %s177, %s191
      %p193 = scmp.eq.s32.totalorder %s31, 0
      %p194 = por %p192, %p193
      %s196 = sadd.s32 %s195, 1
      %p199 = scmp.eq.s32.totalorder %s25, 1
      %p200 = scmp.ne.s32.totalorder %s195, %s197
      %p201 = scmp.eq.s32.totalorder %s25, 0
      %p202 = por %p200, %p201
      %p203 = scmp.ne.s32.totalorder %s195, %s197
      %p204 = scmp.eq.s32.totalorder %s30, 1
      %p205 = por %p203, %p204
      %p206 = scmp.ne.s32.totalorder %s197, %s198
      %p207 = scmp.eq.s32.totalorder %s30, 0
      %p208 = por %p206, %p207
      %p209 = scmp.ne.s32.totalorder %s197, %s198
      %p210 = scmp.eq.s32.totalorder %s31, 1
      %p211 = por %p209, %p210
      %p213 = scmp.ne.s32.totalorder %s198, %s212
      %p214 = scmp.eq.s32.totalorder %s31, 0
      %p215 = por %p213, %p214
      %s216 = ssub.s32 %s25, %s32
      %p217 = scmp.eq.s32.totalorder %s216, 0
      %s219 = sadd.s32 %s218, 1
      %s220 = scalar_select %p217, %s218, %s219
      %p223 = pneg %p217
      %p224 = scmp.eq.s32.totalorder %s25, 1
      %p225 = por %p223, %p224
      %p226 = scmp.ne.s32.totalorder %s218, %s221
      %p227 = scmp.eq.s32.totalorder %s25, 0
      %p228 = por %p226, %p227
      %p229 = scmp.ne.s32.totalorder %s218, %s221
      %p230 = scmp.eq.s32.totalorder %s30, 1
      %p231 = por %p229, %p230
      %p232 = scmp.ne.s32.totalorder %s221, %s222
      %p233 = scmp.eq.s32.totalorder %s30, 0
      %p234 = por %p232, %p233
      %p235 = scmp.ne.s32.totalorder %s221, %s222
      %p236 = scmp.eq.s32.totalorder %s31, 1
      %p237 = por %p235, %p236
      %p239 = scmp.ne.s32.totalorder %s222, %s238
      %p240 = scmp.eq.s32.totalorder %s31, 0
      %p241 = por %p239, %p240
      %p242 = scmp.le.s32.totalorder 1, %s25
      %p243 = scmp.lt.s32.totalorder %s25, 3
      %p244 = pnand %p242, %p243
      %p245 = pneg %p244
      // Predicated region
      $region9: #{tpu_custom_call.1} parent=5 // pred_check
        _
      $region10: #{tpu_custom_call.1} parent=5 // pred_check_branch
        %247 = sbr.rel (%p244) target = $region12
      $region11: #{tpu_custom_call.1} parent=5 // pred_region
        %s248 = ssub.s32 %s25, 1
        // Predicated region
        $region13: #{tpu_custom_call.1} parent=11 // pred_check
          %p249 = pneg %p124
        $region14: #{tpu_custom_call.1} parent=11 // pred_check_branch
          %251 = sbr.rel (%p249) target = $region16
        $region15: #{tpu_custom_call.1} parent=11 // pred_region
          %s253 = ssub.s32 256, 256
          %254 = vsyncadd [#allocation9], %s253
          %s255 = sshll.u32 [#allocation8], 4
          %s256 = int_to_ptr.vmem [resolvable:$true] %s255
          %261 = dma.hbm_to_vmem [thread:$0]  %s3, 256, %s256, [#allocation9], 64, 64, 4
        $region16: #{tpu_custom_call.1} parent=11 // pred_fallthru
          _
        // Predicated region
        $region17: #{tpu_custom_call.1} parent=11 // pred_check
          %p262 = pneg %p145
        $region18: #{tpu_custom_call.1} parent=11 // pred_check_branch
          %264 = sbr.rel (%p262) target = $region20
        $region19: #{tpu_custom_call.1} parent=11 // pred_region
          %s266 = ssub.s32 256, 256
          %267 = vsyncadd [#allocation9], %s266
          %s268 = sshll.u32 [#allocation10], 4
          %s269 = int_to_ptr.vmem [resolvable:$true] %s268
          %274 = dma.hbm_to_vmem [thread:$0]  %s4, 256, %s269, [#allocation9], 64, 64, 4
        $region20: #{tpu_custom_call.1} parent=11 // pred_fallthru
          _
        // Predicated region
        $region21: #{tpu_custom_call.1} parent=11 // pred_check
          %p275 = pneg %p166
        $region22: #{tpu_custom_call.1} parent=11 // pred_check_branch
          %277 = sbr.rel (%p275) target = $region24
        $region23: #{tpu_custom_call.1} parent=11 // pred_region
          %s279 = ssub.s32 256, 256
          %280 = vsyncadd [#allocation12], %s279
          %s281 = sshll.u32 [#allocation11], 4
          %s282 = int_to_ptr.vmem [resolvable:$true] %s281
          %287 = dma.hbm_to_vmem [thread:$0]  %s5, 256, %s282, [#allocation12], 64, 64, 4
        $region24: #{tpu_custom_call.1} parent=11 // pred_fallthru
          _
        // Predicated region
        $region25: #{tpu_custom_call.1} parent=11 // pred_check
          %p288 = pneg %p187
        $region26: #{tpu_custom_call.1} parent=11 // pred_check_branch
          %290 = sbr.rel (%p288) target = $region28
        $region27: #{tpu_custom_call.1} parent=11 // pred_region
          %s292 = ssub.s32 256, 256
          %293 = vsyncadd [#allocation12], %s292
          %s294 = sshll.u32 [#allocation13], 4
          %s295 = int_to_ptr.vmem [resolvable:$true] %s294
          %300 = dma.hbm_to_vmem [thread:$0]  %s6, 256, %s295, [#allocation12], 64, 64, 4
        $region28: #{tpu_custom_call.1} parent=11 // pred_fallthru
          _
        // Predicated region
        $region29: #{tpu_custom_call.1} parent=11 // pred_check
          %p301 = pneg %p208
        $region30: #{tpu_custom_call.1} parent=11 // pred_check_branch
          %303 = sbr.rel (%p301) target = $region32
        $region31: #{tpu_custom_call.1} parent=11 // pred_region
          _
        $region32: #{tpu_custom_call.1} parent=11 // pred_fallthru
          _
      $region12: #{tpu_custom_call.1} parent=5 // pred_fallthru
        _
      %p304 = scmp.lt.s32.totalorder %s25, 2
      // Predicated region
      $region33: #{tpu_custom_call.1} parent=5 // pred_check
        %p305 = pneg %p304
      $region34: #{tpu_custom_call.1} parent=5 // pred_check_branch
        %307 = sbr.rel (%p305) target = $region36
      $region35: #{tpu_custom_call.1} parent=5 // pred_region
        // Predicated region
        $region37: #{tpu_custom_call.1} parent=35 // pred_check
          %p308 = pneg %p45
        $region38: #{tpu_custom_call.1} parent=35 // pred_check_branch
          %310 = sbr.rel (%p308) target = $region40
        $region39: #{tpu_custom_call.1} parent=35 // pred_region
          %s311 = sand.u32 %s35, 1
          %s312 = scalar_lea.sflag [#allocation3], %s311
          %s313 = sand.u32 %s35, 1
          %s314 = smul.addr %s313, 8
          %s315 = scalar_lea.vmem [#allocation2], %s314
          %s317 = ssub.s32 128, 128
          %318 = vsyncadd %s312, %s317
          %s319 = smul.addr %s25, 2
          %s320 = smul.addr %s319, 64
          %s321 = scalar_lea.hbm %s0, %s320
          %s322 = sshll.u32 %s315, 4
          %s323 = int_to_ptr.vmem [resolvable:$true] %s322
          %328 = dma.hbm_to_vmem [thread:$0]  %s321, 128, %s323, %s312, 64, 64, 4
        $region40: #{tpu_custom_call.1} parent=35 // pred_fallthru
          _
        // Predicated region
        $region41: #{tpu_custom_call.1} parent=35 // pred_check
          %p329 = pneg %p71
        $region42: #{tpu_custom_call.1} parent=35 // pred_check_branch
          %331 = sbr.rel (%p329) target = $region44
        $region43: #{tpu_custom_call.1} parent=35 // pred_region
          %s332 = sand.u32 %s25, 1
          %s333 = scalar_lea.sflag [#allocation6], %s332
          %s334 = sand.u32 %s61, 1
          %s335 = smul.addr %s334, 4
          %s336 = scalar_lea.vmem [#allocation5], %s335
          %s338 = ssub.s32 64, 64
          %339 = vsyncadd %s333, %s338
          %s340 = smul.addr %s25, 64
          %s341 = scalar_lea.hbm %s1, %s340
          %s343 = sshll.u32 %s336, 4
          %s344 = int_to_ptr.vmem [resolvable:$true] %s343
          %346 = dma.hbm_to_vmem [thread:$0]  %s341, 64, %s344, %s333
        $region44: #{tpu_custom_call.1} parent=35 // pred_fallthru
          _
        // Predicated region
        $region45: #{tpu_custom_call.1} parent=35 // pred_check
          %p347 = pneg %p97
        $region46: #{tpu_custom_call.1} parent=35 // pred_check_branch
          %349 = sbr.rel (%p347) target = $region48
        $region47: #{tpu_custom_call.1} parent=35 // pred_region
          %s350 = sand.u32 %s25, 1
          %s351 = scalar_lea.sflag [#allocation6], %s350
          %s352 = sand.u32 %s87, 1
          %s353 = smul.addr %s352, 4
          %s354 = scalar_lea.vmem [#allocation7], %s353
          %s356 = ssub.s32 64, 64
          %357 = vsyncadd %s351, %s356
          %s358 = smul.addr %s25, 64
          %s359 = scalar_lea.hbm %s2, %s358
          %s361 = sshll.u32 %s354, 4
          %s362 = int_to_ptr.vmem [resolvable:$true] %s361
          %364 = dma.hbm_to_vmem [thread:$0]  %s359, 64, %s362, %s351
        $region48: #{tpu_custom_call.1} parent=35 // pred_fallthru
          _
      $region36: #{tpu_custom_call.1} parent=5 // pred_fallthru
        _
      %p365 = scmp.le.s32.totalorder 1, %s25
      %p366 = scmp.lt.s32.totalorder %s25, 3
      %p367 = pnand %p365, %p366
      %p368 = pneg %p367
      // Predicated region
      $region49: #{tpu_custom_call.1} parent=5 // pred_check
        _
      $region50: #{tpu_custom_call.1} parent=5 // pred_check_branch
        %370 = sbr.rel (%p367) target = $region52
      $region51: #{tpu_custom_call.1} parent=5 // pred_region
        %s371 = ssub.s32 %s25, 1
        %s372 = sand.u32 %s38, 1
        %s373 = scalar_lea.sflag [#allocation3], %s372
        %s374 = sand.u32 %s38, 1
        %s375 = smul.addr %s374, 8
        %s376 = scalar_lea.vmem [#allocation2], %s375
        // Predicated region
        $region53: #{tpu_custom_call.1} parent=51 // pred_check
          %p377 = pneg %p51
        $region54: #{tpu_custom_call.1} parent=51 // pred_check_branch
          %379 = sbr.rel (%p377) target = $region56
        $region55: #{tpu_custom_call.1} parent=51 // pred_region
          %380 = dma.done %s373, 128
        $region56: #{tpu_custom_call.1} parent=51 // pred_fallthru
          _
        %s381 = sand.u32 %s30, 1
        %s382 = scalar_lea.sflag [#allocation6], %s381
        %s383 = sand.u32 %s64, 1
        %s384 = smul.addr %s383, 4
        %s385 = scalar_lea.vmem [#allocation5], %s384
        // Predicated region
        $region57: #{tpu_custom_call.1} parent=51 // pred_check
          %p386 = pneg %p77
        $region58: #{tpu_custom_call.1} parent=51 // pred_check_branch
          %388 = sbr.rel (%p386) target = $region60
        $region59: #{tpu_custom_call.1} parent=51 // pred_region
          %389 = dma.done %s382, 64
        $region60: #{tpu_custom_call.1} parent=51 // pred_fallthru
          _
        %s390 = sand.u32 %s30, 1
        %s391 = scalar_lea.sflag [#allocation6], %s390
        %s392 = sand.u32 %s90, 1
        %s393 = smul.addr %s392, 4
        %s394 = scalar_lea.vmem [#allocation7], %s393
        // Predicated region
        $region61: #{tpu_custom_call.1} parent=51 // pred_check
          %p395 = pneg %p103
        $region62: #{tpu_custom_call.1} parent=51 // pred_check_branch
          %397 = sbr.rel (%p395) target = $region64
        $region63: #{tpu_custom_call.1} parent=51 // pred_region
          %398 = dma.done %s391, 64
        $region64: #{tpu_custom_call.1} parent=51 // pred_fallthru
          _
        // Predicated region
        $region65: #{tpu_custom_call.1} parent=51 // pred_check
          %p399 = pneg %p124
        $region66: #{tpu_custom_call.1} parent=51 // pred_check_branch
          %401 = sbr.rel (%p399) target = $region68
        $region67: #{tpu_custom_call.1} parent=51 // pred_region
          %402 = dma.done [#allocation9], 256
        $region68: #{tpu_custom_call.1} parent=51 // pred_fallthru
          _
        // Predicated region
        $region69: #{tpu_custom_call.1} parent=51 // pred_check
          %p403 = pneg %p145
        $region70: #{tpu_custom_call.1} parent=51 // pred_check_branch
          %405 = sbr.rel (%p403) target = $region72
        $region71: #{tpu_custom_call.1} parent=51 // pred_region
          %406 = dma.done [#allocation9], 256
        $region72: #{tpu_custom_call.1} parent=51 // pred_fallthru
          _
        // Predicated region
        $region73: #{tpu_custom_call.1} parent=51 // pred_check
          %p407 = pneg %p166
        $region74: #{tpu_custom_call.1} parent=51 // pred_check_branch
          %409 = sbr.rel (%p407) target = $region76
        $region75: #{tpu_custom_call.1} parent=51 // pred_region
          %410 = dma.done [#allocation12], 256
        $region76: #{tpu_custom_call.1} parent=51 // pred_fallthru
          _
        // Predicated region
        $region77: #{tpu_custom_call.1} parent=51 // pred_check
          %p411 = pneg %p187
        $region78: #{tpu_custom_call.1} parent=51 // pred_check_branch
          %413 = sbr.rel (%p411) target = $region80
        $region79: #{tpu_custom_call.1} parent=51 // pred_region
          %414 = dma.done [#allocation12], 256
        $region80: #{tpu_custom_call.1} parent=51 // pred_fallthru
          _
        %s415 = sand.u32 %s38, 1
        %s416 = scalar_lea.sflag [#allocation3], %s415
        %s417 = sand.u32 %s38, 1
        %s418 = smul.addr %s417, 8
        %s419 = scalar_lea.vmem [#allocation2], %s418
        %p420 = pneg %p51
        %p421 = pneg %p48
        %s422 = sand.u32 %s30, 1
        %s423 = scalar_lea.sflag [#allocation6], %s422
        %s424 = sand.u32 %s64, 1
        %s425 = smul.addr %s424, 4
        %s426 = scalar_lea.vmem [#allocation5], %s425
        %p427 = pneg %p77
        %p428 = pneg %p74
        %s429 = sand.u32 %s30, 1
        %s430 = scalar_lea.sflag [#allocation6], %s429
        %s431 = sand.u32 %s90, 1
        %s432 = smul.addr %s431, 4
        %s433 = scalar_lea.vmem [#allocation7], %s432
        %p434 = pneg %p103
        %p435 = pneg %p100
        %p436 = pneg %p124
        %p437 = pneg %p121
        %p438 = pneg %p145
        %p439 = pneg %p142
        %p440 = pneg %p166
        %p441 = pneg %p163
        %p442 = pneg %p187
        %p443 = pneg %p184
        %p444 = pneg %p208
        %p445 = pneg %p205
        %p446 = pneg %p234
        %p447 = pneg %p231
        %s448 = sand.u32 %s221, 1
        %s449 = scalar_lea.sflag [#allocation4], %s448
        %s450 = sand.u32 %s221, 1
        %s451 = smul.addr %s450, 16
        %s452 = scalar_lea.vmem [#allocation14], %s451
        %v454 = vld [vmem:[%s376] sm:$0xf]
        %v455 = vld [vmem:[%s376 + $0x4] sm:$0xf]
        %v456 = vld [vmem:[%s385] sm:$0xf]
        %v457 = vld [vmem:[%s394] sm:$0xf]
        %v458 = vld [vmem:[#allocation8] sm:$0xf]
        %v459 = vld [vmem:[#allocation8 + $0x4] sm:$0xf]
        %v460 = vld [vmem:[#allocation8 + $0x8] sm:$0xf]
        %v461 = vld [vmem:[#allocation8 + $0xc] sm:$0xf]
        %v462 = vld [vmem:[#allocation10] sm:$0xf]
        %v463 = vld [vmem:[#allocation10 + $0x4] sm:$0xf]
        %v464 = vld [vmem:[#allocation10 + $0x8] sm:$0xf]
        %v465 = vld [vmem:[#allocation10 + $0xc] sm:$0xf]
        %v466 = vld [vmem:[#allocation11] sm:$0xf]
        %v467 = vld [vmem:[#allocation11 + $0x4] sm:$0xf]
        %v468 = vld [vmem:[#allocation11 + $0x8] sm:$0xf]
        %v469 = vld [vmem:[#allocation11 + $0xc] sm:$0xf]
        %v470 = vld [vmem:[#allocation13] sm:$0xf]
        %v471 = vld [vmem:[#allocation13 + $0x4] sm:$0xf]
        %v472 = vld [vmem:[#allocation13 + $0x8] sm:$0xf]
        %v473 = vld [vmem:[#allocation13 + $0xc] sm:$0xf]
        %v474 = vld [vmem:[%s7] sm:$0x1]
        %v477 = vunpack.c.l.b16 %v454
        %v478 = vunpack.c.l.b16 %v455
        %v479 = vpack.c.b16 %v478, %v477
        %v484 = vunpack.c.l.b16 %v458
        %v485 = vunpack.c.l.b16 %v459
        %v486 = vunpack.c.l.b16 %v460
        %v487 = vunpack.c.l.b16 %v461
        %v488 = vpack.c.b16 %v485, %v484
        %v489 = vpack.c.b16 %v487, %v486
        %vm492 = vcmask 261120
        %v494 = vsel %vm492, %v479, 0
        %496 = vmatprep.subr.bf16.mxu0 0
        %497 = vmatpush1.bf16.msra.mxu0 0
        %498 = vmatprep.subr.bf16.mxu0 0
        %499 = vmatpush1.bf16.msra.mxu0 0
        %500 = vmatprep.subr.bf16.mxu0 0
        %501 = vmatpush1.bf16.msra.mxu0 0
        %502 = vmatprep.subr.bf16.mxu0 0
        %503 = vmatpush1.bf16.msra.mxu0 0
        %504 = vmatprep.subr.bf16.mxu0 0
        %505 = vmatpush1.bf16.msra.mxu0 0
        %506 = vmatprep.subr.bf16.mxu0 0
        %507 = vmatpush1.bf16.msra.mxu0 0
        %508 = vmatprep.subr.bf16.mxu0 0
        %509 = vmatpush1.bf16.msra.mxu0 %v489
        %510 = vmatprep.subr.bf16.mxu0 0
        %511 = vmatpush1.bf16.msra.mxu0 %v488
        %512 = vmatprep.subr.bf16.mxu0 0
        %513 = vmatpush2.bf16.msra.mxu0 0
        %514 = vmatprep.subr.bf16.mxu0 0
        %515 = vmatpush2.bf16.msra.mxu0 0
        %516 = vmatprep.subr.bf16.mxu0 0
        %517 = vmatpush2.bf16.msra.mxu0 0
        %518 = vmatprep.subr.bf16.mxu0 0
        %519 = vmatpush2.bf16.msra.mxu0 0
        %520 = vmatprep.subr.bf16.mxu0 0
        %521 = vmatpush2.bf16.msra.mxu0 0
        %522 = vmatprep.subr.bf16.mxu0 0
        %523 = vmatpush2.bf16.msra.mxu0 0
        %524 = vmatprep.subr.bf16.mxu0 0
        %525 = vmatpush2.bf16.msra.mxu0 0
        %526 = vmatprep.subr.bf16.mxu0 0
        %527 = vmatpush2.bf16.msra.mxu0 0
        %528 = vmatprep.mubr.bf16.mxu0 0
        %529 = vmatmul.mubr.bf16.gmra.mxu0 %v494
        %v530 = vpop.f32.mrf.mxu0
        %v531 = vadd.f32 0.0, %v530
        %v532 = vpop.f32.mrf.mxu0
        %v533 = vpop.f32.mrf.mxu0
        %v534 = vadd.f32 0.0, %v533
        %v535 = vpop.f32.mrf.mxu0
        %536 = vdwg.mxu0
        %v541 = vunpack.c.l.b16 %v462
        %v542 = vunpack.c.l.b16 %v463
        %v543 = vunpack.c.l.b16 %v464
        %v544 = vunpack.c.l.b16 %v465
        %v545 = vpack.c.b16 %v542, %v541
        %v546 = vpack.c.b16 %v544, %v543
        %v550 = vsel %vm492, %v456, 0
        %552 = vmatprep.subr.bf16.mxu0 0
        %553 = vmatpush1.bf16.msra.mxu0 0
        %554 = vmatprep.subr.bf16.mxu0 0
        %555 = vmatpush1.bf16.msra.mxu0 0
        %556 = vmatprep.subr.bf16.mxu0 0
        %557 = vmatpush1.bf16.msra.mxu0 0
        %558 = vmatprep.subr.bf16.mxu0 0
        %559 = vmatpush1.bf16.msra.mxu0 0
        %560 = vmatprep.subr.bf16.mxu0 0
        %561 = vmatpush1.bf16.msra.mxu0 0
        %562 = vmatprep.subr.bf16.mxu0 0
        %563 = vmatpush1.bf16.msra.mxu0 0
        %564 = vmatprep.subr.bf16.mxu0 0
        %565 = vmatpush1.bf16.msra.mxu0 %v546
        %566 = vmatprep.subr.bf16.mxu0 0
        %567 = vmatpush1.bf16.msra.mxu0 %v545
        %568 = vmatprep.subr.bf16.mxu0 0
        %569 = vmatpush2.bf16.msra.mxu0 0
        %570 = vmatprep.subr.bf16.mxu0 0
        %571 = vmatpush2.bf16.msra.mxu0 0
        %572 = vmatprep.subr.bf16.mxu0 0
        %573 = vmatpush2.bf16.msra.mxu0 0
        %574 = vmatprep.subr.bf16.mxu0 0
        %575 = vmatpush2.bf16.msra.mxu0 0
        %576 = vmatprep.subr.bf16.mxu0 0
        %577 = vmatpush2.bf16.msra.mxu0 0
        %578 = vmatprep.subr.bf16.mxu0 0
        %579 = vmatpush2.bf16.msra.mxu0 0
        %580 = vmatprep.subr.bf16.mxu0 0
        %581 = vmatpush2.bf16.msra.mxu0 0
        %582 = vmatprep.subr.bf16.mxu0 0
        %583 = vmatpush2.bf16.msra.mxu0 0
        %584 = vmatprep.mubr.bf16.mxu0 0
        %585 = vmatmul.mubr.bf16.gmra.mxu0 %v550
        %v586 = vpop.f32.mrf.mxu0
        %v587 = vadd.f32 0.0, %v586
        %v588 = vpop.f32.mrf.mxu0
        %v589 = vpop.f32.mrf.mxu0
        %v590 = vpop.f32.mrf.mxu0
        %591 = vdwg.mxu0
        %v596 = vunpack.c.l.b16 %v466
        %v597 = vunpack.c.l.b16 %v467
        %v598 = vunpack.c.l.b16 %v468
        %v599 = vunpack.c.l.b16 %v469
        %v600 = vpack.c.b16 %v597, %v596
        %v601 = vpack.c.b16 %v599, %v598
        %v605 = vsel %vm492, %v457, 0
        %607 = vmatprep.subr.bf16.mxu0 0
        %608 = vmatpush1.bf16.msra.mxu0 0
        %609 = vmatprep.subr.bf16.mxu0 0
        %610 = vmatpush1.bf16.msra.mxu0 0
        %611 = vmatprep.subr.bf16.mxu0 0
        %612 = vmatpush1.bf16.msra.mxu0 0
        %613 = vmatprep.subr.bf16.mxu0 0
        %614 = vmatpush1.bf16.msra.mxu0 0
        %615 = vmatprep.subr.bf16.mxu0 0
        %616 = vmatpush1.bf16.msra.mxu0 0
        %617 = vmatprep.subr.bf16.mxu0 0
        %618 = vmatpush1.bf16.msra.mxu0 0
        %619 = vmatprep.subr.bf16.mxu0 0
        %620 = vmatpush1.bf16.msra.mxu0 %v601
        %621 = vmatprep.subr.bf16.mxu0 0
        %622 = vmatpush1.bf16.msra.mxu0 %v600
        %623 = vmatprep.subr.bf16.mxu0 0
        %624 = vmatpush2.bf16.msra.mxu0 0
        %625 = vmatprep.subr.bf16.mxu0 0
        %626 = vmatpush2.bf16.msra.mxu0 0
        %627 = vmatprep.subr.bf16.mxu0 0
        %628 = vmatpush2.bf16.msra.mxu0 0
        %629 = vmatprep.subr.bf16.mxu0 0
        %630 = vmatpush2.bf16.msra.mxu0 0
        %631 = vmatprep.subr.bf16.mxu0 0
        %632 = vmatpush2.bf16.msra.mxu0 0
        %633 = vmatprep.subr.bf16.mxu0 0
        %634 = vmatpush2.bf16.msra.mxu0 0
        %635 = vmatprep.subr.bf16.mxu0 0
        %636 = vmatpush2.bf16.msra.mxu0 0
        %637 = vmatprep.subr.bf16.mxu0 0
        %638 = vmatpush2.bf16.msra.mxu0 0
        %639 = vmatprep.mubr.bf16.mxu0 0
        %640 = vmatmul.mubr.bf16.gmra.mxu0 %v605
        %v641 = vpop.f32.mrf.mxu0
        %v642 = vadd.f32 0.0, %v641
        %v643 = vpop.f32.mrf.mxu0
        %v644 = vpop.f32.mrf.mxu0
        %v645 = vpop.f32.mrf.mxu0
        %646 = vdwg.mxu0
        %v647 = vpack.c.bf16 %v534, %v531
        %v648 = vpack.c.bf16 %v587, %v587
        %v649 = vpack.c.bf16 %v642, %v642
        %vm650 = vcmask 64512
        %v652 = vsel %vm650, %v647, 0
        %v655 = vsel %vm650, %v648, 0
        %657 = vmatprep.subr.bf16.mxu0 0
        %658 = vmatpush1.bf16.xpose.msra.mxu0 0
        %659 = vmatprep.subr.bf16.mxu0 0
        %660 = vmatpush1.bf16.xpose.msra.mxu0 0
        %661 = vmatprep.subr.bf16.mxu0 0
        %662 = vmatpush1.bf16.xpose.msra.mxu0 0
        %663 = vmatprep.subr.bf16.mxu0 0
        %664 = vmatpush1.bf16.xpose.msra.mxu0 0
        %665 = vmatprep.subr.bf16.mxu0 0
        %666 = vmatpush1.bf16.xpose.msra.mxu0 0
        %667 = vmatprep.subr.bf16.mxu0 0
        %668 = vmatpush1.bf16.xpose.msra.mxu0 0
        %669 = vmatprep.subr.bf16.mxu0 0
        %670 = vmatpush1.bf16.xpose.msra.mxu0 0
        %671 = vmatprep.subr.bf16.mxu0 0
        %672 = vmatpush1.bf16.xpose.msra.mxu0 %v655
        %673 = vmatprep.subr.bf16.mxu0 0
        %674 = vmatpush2.bf16.xpose.msra.mxu0 0
        %675 = vmatprep.subr.bf16.mxu0 0
        %676 = vmatpush2.bf16.xpose.msra.mxu0 0
        %677 = vmatprep.subr.bf16.mxu0 0
        %678 = vmatpush2.bf16.xpose.msra.mxu0 0
        %679 = vmatprep.subr.bf16.mxu0 0
        %680 = vmatpush2.bf16.xpose.msra.mxu0 0
        %681 = vmatprep.subr.bf16.mxu0 0
        %682 = vmatpush2.bf16.xpose.msra.mxu0 0
        %683 = vmatprep.subr.bf16.mxu0 0
        %684 = vmatpush2.bf16.xpose.msra.mxu0 0
        %685 = vmatprep.subr.bf16.mxu0 0
        %686 = vmatpush2.bf16.xpose.msra.mxu0 0
        %687 = vmatprep.subr.bf16.mxu0 0
        %688 = vmatpush2.bf16.xpose.msra.mxu0 0
        %689 = vmatprep.mubr.bf16.mxu0 0
        %690 = vmatmul.mubr.bf16.gmra.mxu0 %v652
        %v691 = vpop.f32.mrf.mxu0
        %v692 = vadd.f32 0.0, %v691
        %v693 = vpop.f32.mrf.mxu0
        %v694 = vpop.f32.mrf.mxu0
        %v695 = vadd.f32 0.0, %v694
        %v696 = vpop.f32.mrf.mxu0
        %697 = vdwg.mxu0
        %v698 = vsel %vm650, %v692, -inf
        %699 = vmax.xlane.f32.xlu0 %v698
        %v700 = vpop.xlane.xlu0 %699
        %v701 = vsel %vm650, %v695, -inf
        %702 = vmax.xlane.f32.xlu0 %v701
        %v703 = vpop.xlane.xlu0 %702
        %v704 = vsub.f32 %v692, %v700
        %v705 = vsub.f32 %v695, %v703
        %v706 = vmul.f32 %v704, 1.442695
        %v707 = vpow.pop %v706
        %v708 = vmul.f32 %v705, 1.442695
        %v709 = vpow.pop %v708
        %v710 = vsel %vm650, %v707, 0.0
        %711 = vadd.xlane.f32.xlu0 %v710
        %v712 = vpop.xlane.xlu0 %711
        %v713 = vsel %vm650, %v709, 0.0
        %714 = vadd.xlane.f32.xlu0 %v713
        %v715 = vpop.xlane.xlu0 %714
        %v716 = vrcp.pop %v712
        %v717 = vrcp.pop %v715
        %v718 = vmul.f32 %v707, %v716
        %v719 = vmul.f32 %v709, %v717
        %v720 = vpack.c.bf16 %v719, %v718
        %v722 = vsel %vm650, %v720, 0
        %vm724 = vcmask 1043456
        %v726 = vsel %vm724, %v649, 0
        %728 = vmatprep.subr.bf16.mxu0 0
        %729 = vmatpush1.bf16.msra.mxu0 0
        %730 = vmatprep.subr.bf16.mxu0 0
        %731 = vmatpush1.bf16.msra.mxu0 0
        %732 = vmatprep.subr.bf16.mxu0 0
        %733 = vmatpush1.bf16.msra.mxu0 0
        %734 = vmatprep.subr.bf16.mxu0 0
        %735 = vmatpush1.bf16.msra.mxu0 0
        %736 = vmatprep.subr.bf16.mxu0 0
        %737 = vmatpush1.bf16.msra.mxu0 0
        %738 = vmatprep.subr.bf16.mxu0 0
        %739 = vmatpush1.bf16.msra.mxu0 0
        %740 = vmatprep.subr.bf16.mxu0 0
        %741 = vmatpush1.bf16.msra.mxu0 0
        %742 = vmatprep.subr.bf16.mxu0 0
        %743 = vmatpush1.bf16.msra.mxu0 %v726
        %744 = vmatprep.subr.bf16.mxu0 0
        %745 = vmatpush2.bf16.msra.mxu0 0
        %746 = vmatprep.subr.bf16.mxu0 0
        %747 = vmatpush2.bf16.msra.mxu0 0
        %748 = vmatprep.subr.bf16.mxu0 0
        %749 = vmatpush2.bf16.msra.mxu0 0
        %750 = vmatprep.subr.bf16.mxu0 0
        %751 = vmatpush2.bf16.msra.mxu0 0
        %752 = vmatprep.subr.bf16.mxu0 0
        %753 = vmatpush2.bf16.msra.mxu0 0
        %754 = vmatprep.subr.bf16.mxu0 0
        %755 = vmatpush2.bf16.msra.mxu0 0
        %756 = vmatprep.subr.bf16.mxu0 0
        %757 = vmatpush2.bf16.msra.mxu0 0
        %758 = vmatprep.subr.bf16.mxu0 0
        %759 = vmatpush2.bf16.msra.mxu0 0
        %760 = vmatprep.mubr.bf16.mxu0 0
        %761 = vmatmul.mubr.bf16.gmra.mxu0 %v722
        %v762 = vpop.f32.mrf.mxu0
        %v763 = vadd.f32 0.0, %v762
        %v764 = vpop.f32.mrf.mxu0
        %v765 = vpop.f32.mrf.mxu0
        %v766 = vadd.f32 0.0, %v765
        %v767 = vpop.f32.mrf.mxu0
        %768 = vdwg.mxu0
        %770 = vrot.lane.b32.xlu0 %v647, 120
        %v771 = vpop.permute.xlu0 %770
        %773 = vrot.lane.b32.xlu0 %v648, 120
        %v774 = vpop.permute.xlu0 %773
        %v776 = vsel %vm650, %v771, 0
        %v779 = vsel %vm650, %v774, 0
        %781 = vmatprep.subr.bf16.mxu0 0
        %782 = vmatpush1.bf16.xpose.msra.mxu0 0
        %783 = vmatprep.subr.bf16.mxu0 0
        %784 = vmatpush1.bf16.xpose.msra.mxu0 0
        %785 = vmatprep.subr.bf16.mxu0 0
        %786 = vmatpush1.bf16.xpose.msra.mxu0 0
        %787 = vmatprep.subr.bf16.mxu0 0
        %788 = vmatpush1.bf16.xpose.msra.mxu0 0
        %789 = vmatprep.subr.bf16.mxu0 0
        %790 = vmatpush1.bf16.xpose.msra.mxu0 0
        %791 = vmatprep.subr.bf16.mxu0 0
        %792 = vmatpush1.bf16.xpose.msra.mxu0 0
        %793 = vmatprep.subr.bf16.mxu0 0
        %794 = vmatpush1.bf16.xpose.msra.mxu0 0
        %795 = vmatprep.subr.bf16.mxu0 0
        %796 = vmatpush1.bf16.xpose.msra.mxu0 %v779
        %797 = vmatprep.subr.bf16.mxu0 0
        %798 = vmatpush2.bf16.xpose.msra.mxu0 0
        %799 = vmatprep.subr.bf16.mxu0 0
        %800 = vmatpush2.bf16.xpose.msra.mxu0 0
        %801 = vmatprep.subr.bf16.mxu0 0
        %802 = vmatpush2.bf16.xpose.msra.mxu0 0
        %803 = vmatprep.subr.bf16.mxu0 0
        %804 = vmatpush2.bf16.xpose.msra.mxu0 0
        %805 = vmatprep.subr.bf16.mxu0 0
        %806 = vmatpush2.bf16.xpose.msra.mxu0 0
        %807 = vmatprep.subr.bf16.mxu0 0
        %808 = vmatpush2.bf16.xpose.msra.mxu0 0
        %809 = vmatprep.subr.bf16.mxu0 0
        %810 = vmatpush2.bf16.xpose.msra.mxu0 0
        %811 = vmatprep.subr.bf16.mxu0 0
        %812 = vmatpush2.bf16.xpose.msra.mxu0 0
        %813 = vmatprep.mubr.bf16.mxu0 0
        %814 = vmatmul.mubr.bf16.gmra.mxu0 %v776
        %v815 = vpop.f32.mrf.mxu0
        %v816 = vadd.f32 0.0, %v815
        %v817 = vpop.f32.mrf.mxu0
        %v818 = vpop.f32.mrf.mxu0
        %v819 = vadd.f32 0.0, %v818
        %v820 = vpop.f32.mrf.mxu0
        %821 = vdwg.mxu0
        %v822 = vsel %vm650, %v816, -inf
        %823 = vmax.xlane.f32.xlu0 %v822
        %v824 = vpop.xlane.xlu0 %823
        %v825 = vsel %vm650, %v819, -inf
        %826 = vmax.xlane.f32.xlu0 %v825
        %v827 = vpop.xlane.xlu0 %826
        %v828 = vsub.f32 %v816, %v824
        %v829 = vsub.f32 %v819, %v827
        %v830 = vmul.f32 %v828, 1.442695
        %v831 = vpow.pop %v830
        %v832 = vmul.f32 %v829, 1.442695
        %v833 = vpow.pop %v832
        %v834 = vsel %vm650, %v831, 0.0
        %835 = vadd.xlane.f32.xlu0 %v834
        %v836 = vpop.xlane.xlu0 %835
        %v837 = vsel %vm650, %v833, 0.0
        %838 = vadd.xlane.f32.xlu0 %v837
        %v839 = vpop.xlane.xlu0 %838
        %v840 = vrcp.pop %v836
        %v841 = vrcp.pop %v839
        %v842 = vmul.f32 %v831, %v840
        %v843 = vmul.f32 %v833, %v841
        %v844 = vpack.c.bf16 %v843, %v842
        %846 = vrot.lane.b32.xlu0 %v649, 120
        %v847 = vpop.permute.xlu0 %846
        %v849 = vsel %vm650, %v844, 0
        %v852 = vsel %vm724, %v847, 0
        %854 = vmatprep.subr.bf16.mxu0 0
        %855 = vmatpush1.bf16.msra.mxu0 0
        %856 = vmatprep.subr.bf16.mxu0 0
        %857 = vmatpush1.bf16.msra.mxu0 0
        %858 = vmatprep.subr.bf16.mxu0 0
        %859 = vmatpush1.bf16.msra.mxu0 0
        %860 = vmatprep.subr.bf16.mxu0 0
        %861 = vmatpush1.bf16.msra.mxu0 0
        %862 = vmatprep.subr.bf16.mxu0 0
        %863 = vmatpush1.bf16.msra.mxu0 0
        %864 = vmatprep.subr.bf16.mxu0 0
        %865 = vmatpush1.bf16.msra.mxu0 0
        %866 = vmatprep.subr.bf16.mxu0 0
        %867 = vmatpush1.bf16.msra.mxu0 0
        %868 = vmatprep.subr.bf16.mxu0 0
        %869 = vmatpush1.bf16.msra.mxu0 %v852
        %870 = vmatprep.subr.bf16.mxu0 0
        %871 = vmatpush2.bf16.msra.mxu0 0
        %872 = vmatprep.subr.bf16.mxu0 0
        %873 = vmatpush2.bf16.msra.mxu0 0
        %874 = vmatprep.subr.bf16.mxu0 0
        %875 = vmatpush2.bf16.msra.mxu0 0
        %876 = vmatprep.subr.bf16.mxu0 0
        %877 = vmatpush2.bf16.msra.mxu0 0
        %878 = vmatprep.subr.bf16.mxu0 0
        %879 = vmatpush2.bf16.msra.mxu0 0
        %880 = vmatprep.subr.bf16.mxu0 0
        %881 = vmatpush2.bf16.msra.mxu0 0
        %882 = vmatprep.subr.bf16.mxu0 0
        %883 = vmatpush2.bf16.msra.mxu0 0
        %884 = vmatprep.subr.bf16.mxu0 0
        %885 = vmatpush2.bf16.msra.mxu0 0
        %886 = vmatprep.mubr.bf16.mxu0 0
        %887 = vmatmul.mubr.bf16.gmra.mxu0 %v849
        %v888 = vpop.f32.mrf.mxu0
        %v889 = vadd.f32 0.0, %v888
        %v890 = vpop.f32.mrf.mxu0
        %v891 = vpop.f32.mrf.mxu0
        %v892 = vadd.f32 0.0, %v891
        %v893 = vpop.f32.mrf.mxu0
        %894 = vdwg.mxu0
        %895 = vrot.lane.b32.xlu0 %v647, 112
        %v896 = vpop.permute.xlu0 %895
        %897 = vrot.lane.b32.xlu0 %v648, 112
        %v898 = vpop.permute.xlu0 %897
        %v900 = vsel %vm650, %v896, 0
        %v903 = vsel %vm650, %v898, 0
        %905 = vmatprep.subr.bf16.mxu0 0
        %906 = vmatpush1.bf16.xpose.msra.mxu0 0
        %907 = vmatprep.subr.bf16.mxu0 0
        %908 = vmatpush1.bf16.xpose.msra.mxu0 0
        %909 = vmatprep.subr.bf16.mxu0 0
        %910 = vmatpush1.bf16.xpose.msra.mxu0 0
        %911 = vmatprep.subr.bf16.mxu0 0
        %912 = vmatpush1.bf16.xpose.msra.mxu0 0
        %913 = vmatprep.subr.bf16.mxu0 0
        %914 = vmatpush1.bf16.xpose.msra.mxu0 0
        %915 = vmatprep.subr.bf16.mxu0 0
        %916 = vmatpush1.bf16.xpose.msra.mxu0 0
        %917 = vmatprep.subr.bf16.mxu0 0
        %918 = vmatpush1.bf16.xpose.msra.mxu0 0
        %919 = vmatprep.subr.bf16.mxu0 0
        %920 = vmatpush1.bf16.xpose.msra.mxu0 %v903
        %921 = vmatprep.subr.bf16.mxu0 0
        %922 = vmatpush2.bf16.xpose.msra.mxu0 0
        %923 = vmatprep.subr.bf16.mxu0 0
        %924 = vmatpush2.bf16.xpose.msra.mxu0 0
        %925 = vmatprep.subr.bf16.mxu0 0
        %926 = vmatpush2.bf16.xpose.msra.mxu0 0
        %927 = vmatprep.subr.bf16.mxu0 0
        %928 = vmatpush2.bf16.xpose.msra.mxu0 0
        %929 = vmatprep.subr.bf16.mxu0 0
        %930 = vmatpush2.bf16.xpose.msra.mxu0 0
        %931 = vmatprep.subr.bf16.mxu0 0
        %932 = vmatpush2.bf16.xpose.msra.mxu0 0
        %933 = vmatprep.subr.bf16.mxu0 0
        %934 = vmatpush2.bf16.xpose.msra.mxu0 0
        %935 = vmatprep.subr.bf16.mxu0 0
        %936 = vmatpush2.bf16.xpose.msra.mxu0 0
        %937 = vmatprep.mubr.bf16.mxu0 0
        %938 = vmatmul.mubr.bf16.gmra.mxu0 %v900
        %v939 = vpop.f32.mrf.mxu0
        %v940 = vadd.f32 0.0, %v939
        %v941 = vpop.f32.mrf.mxu0
        %v942 = vpop.f32.mrf.mxu0
        %v943 = vadd.f32 0.0, %v942
        %v944 = vpop.f32.mrf.mxu0
        %945 = vdwg.mxu0
        %v946 = vsel %vm650, %v940, -inf
        %947 = vmax.xlane.f32.xlu0 %v946
        %v948 = vpop.xlane.xlu0 %947
        %v949 = vsel %vm650, %v943, -inf
        %950 = vmax.xlane.f32.xlu0 %v949
        %v951 = vpop.xlane.xlu0 %950
        %v952 = vsub.f32 %v940, %v948
        %v953 = vsub.f32 %v943, %v951
        %v954 = vmul.f32 %v952, 1.442695
        %v955 = vpow.pop %v954
        %v956 = vmul.f32 %v953, 1.442695
        %v957 = vpow.pop %v956
        %v958 = vsel %vm650, %v955, 0.0
        %959 = vadd.xlane.f32.xlu0 %v958
        %v960 = vpop.xlane.xlu0 %959
        %v961 = vsel %vm650, %v957, 0.0
        %962 = vadd.xlane.f32.xlu0 %v961
        %v963 = vpop.xlane.xlu0 %962
        %v964 = vrcp.pop %v960
        %v965 = vrcp.pop %v963
        %v966 = vmul.f32 %v955, %v964
        %v967 = vmul.f32 %v957, %v965
        %v968 = vpack.c.bf16 %v967, %v966
        %969 = vrot.lane.b32.xlu0 %v649, 112
        %v970 = vpop.permute.xlu0 %969
        %v972 = vsel %vm650, %v968, 0
        %v975 = vsel %vm724, %v970, 0
        %977 = vmatprep.subr.bf16.mxu0 0
        %978 = vmatpush1.bf16.msra.mxu0 0
        %979 = vmatprep.subr.bf16.mxu0 0
        %980 = vmatpush1.bf16.msra.mxu0 0
        %981 = vmatprep.subr.bf16.mxu0 0
        %982 = vmatpush1.bf16.msra.mxu0 0
        %983 = vmatprep.subr.bf16.mxu0 0
        %984 = vmatpush1.bf16.msra.mxu0 0
        %985 = vmatprep.subr.bf16.mxu0 0
        %986 = vmatpush1.bf16.msra.mxu0 0
        %987 = vmatprep.subr.bf16.mxu0 0
        %988 = vmatpush1.bf16.msra.mxu0 0
        %989 = vmatprep.subr.bf16.mxu0 0
        %990 = vmatpush1.bf16.msra.mxu0 0
        %991 = vmatprep.subr.bf16.mxu0 0
        %992 = vmatpush1.bf16.msra.mxu0 %v975
        %993 = vmatprep.subr.bf16.mxu0 0
        %994 = vmatpush2.bf16.msra.mxu0 0
        %995 = vmatprep.subr.bf16.mxu0 0
        %996 = vmatpush2.bf16.msra.mxu0 0
        %997 = vmatprep.subr.bf16.mxu0 0
        %998 = vmatpush2.bf16.msra.mxu0 0
        %999 = vmatprep.subr.bf16.mxu0 0
        %1000 = vmatpush2.bf16.msra.mxu0 0
        %1001 = vmatprep.subr.bf16.mxu0 0
        %1002 = vmatpush2.bf16.msra.mxu0 0
        %1003 = vmatprep.subr.bf16.mxu0 0
        %1004 = vmatpush2.bf16.msra.mxu0 0
        %1005 = vmatprep.subr.bf16.mxu0 0
        %1006 = vmatpush2.bf16.msra.mxu0 0
        %1007 = vmatprep.subr.bf16.mxu0 0
        %1008 = vmatpush2.bf16.msra.mxu0 0
        %1009 = vmatprep.mubr.bf16.mxu0 0
        %1010 = vmatmul.mubr.bf16.gmra.mxu0 %v972
        %v1011 = vpop.f32.mrf.mxu0
        %v1012 = vadd.f32 0.0, %v1011
        %v1013 = vpop.f32.mrf.mxu0
        %v1014 = vpop.f32.mrf.mxu0
        %v1015 = vadd.f32 0.0, %v1014
        %v1016 = vpop.f32.mrf.mxu0
        %1017 = vdwg.mxu0
        %1018 = vrot.lane.b32.xlu0 %v647, 104
        %v1019 = vpop.permute.xlu0 %1018
        %1020 = vrot.lane.b32.xlu0 %v648, 104
        %v1021 = vpop.permute.xlu0 %1020
        %v1023 = vsel %vm650, %v1019, 0
        %v1026 = vsel %vm650, %v1021, 0
        %1028 = vmatprep.subr.bf16.mxu0 0
        %1029 = vmatpush1.bf16.xpose.msra.mxu0 0
        %1030 = vmatprep.subr.bf16.mxu0 0
        %1031 = vmatpush1.bf16.xpose.msra.mxu0 0
        %1032 = vmatprep.subr.bf16.mxu0 0
        %1033 = vmatpush1.bf16.xpose.msra.mxu0 0
        %1034 = vmatprep.subr.bf16.mxu0 0
        %1035 = vmatpush1.bf16.xpose.msra.mxu0 0
        %1036 = vmatprep.subr.bf16.mxu0 0
        %1037 = vmatpush1.bf16.xpose.msra.mxu0 0
        %1038 = vmatprep.subr.bf16.mxu0 0
        %1039 = vmatpush1.bf16.xpose.msra.mxu0 0
        %1040 = vmatprep.subr.bf16.mxu0 0
        %1041 = vmatpush1.bf16.xpose.msra.mxu0 0
        %1042 = vmatprep.subr.bf16.mxu0 0
        %1043 = vmatpush1.bf16.xpose.msra.mxu0 %v1026
        %1044 = vmatprep.subr.bf16.mxu0 0
        %1045 = vmatpush2.bf16.xpose.msra.mxu0 0
        %1046 = vmatprep.subr.bf16.mxu0 0
        %1047 = vmatpush2.bf16.xpose.msra.mxu0 0
        %1048 = vmatprep.subr.bf16.mxu0 0
        %1049 = vmatpush2.bf16.xpose.msra.mxu0 0
        %1050 = vmatprep.subr.bf16.mxu0 0
        %1051 = vmatpush2.bf16.xpose.msra.mxu0 0
        %1052 = vmatprep.subr.bf16.mxu0 0
        %1053 = vmatpush2.bf16.xpose.msra.mxu0 0
        %1054 = vmatprep.subr.bf16.mxu0 0
        %1055 = vmatpush2.bf16.xpose.msra.mxu0 0
        %1056 = vmatprep.subr.bf16.mxu0 0
        %1057 = vmatpush2.bf16.xpose.msra.mxu0 0
        %1058 = vmatprep.subr.bf16.mxu0 0
        %1059 = vmatpush2.bf16.xpose.msra.mxu0 0
        %1060 = vmatprep.mubr.bf16.mxu0 0
        %1061 = vmatmul.mubr.bf16.gmra.mxu0 %v1023
        %v1062 = vpop.f32.mrf.mxu0
        %v1063 = vadd.f32 0.0, %v1062
        %v1064 = vpop.f32.mrf.mxu0
        %v1065 = vpop.f32.mrf.mxu0
        %v1066 = vadd.f32 0.0, %v1065
        %v1067 = vpop.f32.mrf.mxu0
        %1068 = vdwg.mxu0
        %v1069 = vsel %vm650, %v1063, -inf
        %1070 = vmax.xlane.f32.xlu0 %v1069
        %v1071 = vpop.xlane.xlu0 %1070
        %v1072 = vsel %vm650, %v1066, -inf
        %1073 = vmax.xlane.f32.xlu0 %v1072
        %v1074 = vpop.xlane.xlu0 %1073
        %v1075 = vsub.f32 %v1063, %v1071
        %v1076 = vsub.f32 %v1066, %v1074
        %v1077 = vmul.f32 %v1075, 1.442695
        %v1078 = vpow.pop %v1077
        %v1079 = vmul.f32 %v1076, 1.442695
        %v1080 = vpow.pop %v1079
        %v1081 = vsel %vm650, %v1078, 0.0
        %1082 = vadd.xlane.f32.xlu0 %v1081
        %v1083 = vpop.xlane.xlu0 %1082
        %v1084 = vsel %vm650, %v1080, 0.0
        %1085 = vadd.xlane.f32.xlu0 %v1084
        %v1086 = vpop.xlane.xlu0 %1085
        %v1087 = vrcp.pop %v1083
        %v1088 = vrcp.pop %v1086
        %v1089 = vmul.f32 %v1078, %v1087
        %v1090 = vmul.f32 %v1080, %v1088
        %v1091 = vpack.c.bf16 %v1090, %v1089
        %1092 = vrot.lane.b32.xlu0 %v649, 104
        %v1093 = vpop.permute.xlu0 %1092
        %v1095 = vsel %vm650, %v1091, 0
        %v1098 = vsel %vm724, %v1093, 0
        %1100 = vmatprep.subr.bf16.mxu0 0
        %1101 = vmatpush1.bf16.msra.mxu0 0
        %1102 = vmatprep.subr.bf16.mxu0 0
        %1103 = vmatpush1.bf16.msra.mxu0 0
        %1104 = vmatprep.subr.bf16.mxu0 0
        %1105 = vmatpush1.bf16.msra.mxu0 0
        %1106 = vmatprep.subr.bf16.mxu0 0
        %1107 = vmatpush1.bf16.msra.mxu0 0
        %1108 = vmatprep.subr.bf16.mxu0 0
        %1109 = vmatpush1.bf16.msra.mxu0 0
        %1110 = vmatprep.subr.bf16.mxu0 0
        %1111 = vmatpush1.bf16.msra.mxu0 0
        %1112 = vmatprep.subr.bf16.mxu0 0
        %1113 = vmatpush1.bf16.msra.mxu0 0
        %1114 = vmatprep.subr.bf16.mxu0 0
        %1115 = vmatpush1.bf16.msra.mxu0 %v1098
        %1116 = vmatprep.subr.bf16.mxu0 0
        %1117 = vmatpush2.bf16.msra.mxu0 0
        %1118 = vmatprep.subr.bf16.mxu0 0
        %1119 = vmatpush2.bf16.msra.mxu0 0
        %1120 = vmatprep.subr.bf16.mxu0 0
        %1121 = vmatpush2.bf16.msra.mxu0 0
        %1122 = vmatprep.subr.bf16.mxu0 0
        %1123 = vmatpush2.bf16.msra.mxu0 0
        %1124 = vmatprep.subr.bf16.mxu0 0
        %1125 = vmatpush2.bf16.msra.mxu0 0
        %1126 = vmatprep.subr.bf16.mxu0 0
        %1127 = vmatpush2.bf16.msra.mxu0 0
        %1128 = vmatprep.subr.bf16.mxu0 0
        %1129 = vmatpush2.bf16.msra.mxu0 0
        %1130 = vmatprep.subr.bf16.mxu0 0
        %1131 = vmatpush2.bf16.msra.mxu0 0
        %1132 = vmatprep.mubr.bf16.mxu0 0
        %1133 = vmatmul.mubr.bf16.gmra.mxu0 %v1095
        %v1134 = vpop.f32.mrf.mxu0
        %v1135 = vadd.f32 0.0, %v1134
        %v1136 = vpop.f32.mrf.mxu0
        %v1137 = vpop.f32.mrf.mxu0
        %v1138 = vadd.f32 0.0, %v1137
        %v1139 = vpop.f32.mrf.mxu0
        %1140 = vdwg.mxu0
        %1143 = vrot.lane.b32.xlu0 %v889, 8
        %v1144 = vpop.permute.xlu0 %1143
        %1145 = vrot.lane.b32.xlu0 %v892, 8
        %v1146 = vpop.permute.xlu0 %1145
        %1151 = vrot.lane.b32.xlu0 %v1012, 16
        %v1152 = vpop.permute.xlu0 %1151
        %1153 = vrot.lane.b32.xlu0 %v1015, 16
        %v1154 = vpop.permute.xlu0 %1153
        %1159 = vrot.lane.b32.xlu0 %v1135, 24
        %v1160 = vpop.permute.xlu0 %1159
        %1161 = vrot.lane.b32.xlu0 %v1138, 24
        %v1162 = vpop.permute.xlu0 %1161
        %v1165 = vsel %vm650, %v763, %v1144
        %v1166 = vsel %vm650, %v766, %v1146
        %vm1167 = vcmask 130048
        %v1168 = vsel %vm1167, %v1165, %v1152
        %v1169 = vsel %vm1167, %v1166, %v1154
        %vm1170 = vcmask 195584
        %v1171 = vsel %vm1170, %v1168, %v1160
        %v1172 = vsel %vm1170, %v1169, %v1162
        %v1173 = vpack.c.bf16 %v1172, %v1171
        %v1175 = vlaneseq
        %v1176 = vshrl.u32 %v1175, 7
        %v1177 = vsub.s32 0, %v1176
        %v1178 = vrot.slane %v474, %v1177
        %v1184 = vunpack.c.l.b16 %v470
        %v1185 = vunpack.c.l.b16 %v471
        %v1186 = vunpack.c.l.b16 %v472
        %v1187 = vunpack.c.l.b16 %v473
        %v1188 = vpack.c.b16 %v1185, %v1184
        %v1189 = vpack.c.b16 %v1187, %v1186
        %v1193 = vsel %vm492, %v1173, 0
        %1195 = vmatprep.subr.bf16.mxu0 0
        %1196 = vmatpush1.bf16.msra.mxu0 0
        %1197 = vmatprep.subr.bf16.mxu0 0
        %1198 = vmatpush1.bf16.msra.mxu0 0
        %1199 = vmatprep.subr.bf16.mxu0 0
        %1200 = vmatpush1.bf16.msra.mxu0 0
        %1201 = vmatprep.subr.bf16.mxu0 0
        %1202 = vmatpush1.bf16.msra.mxu0 0
        %1203 = vmatprep.subr.bf16.mxu0 0
        %1204 = vmatpush1.bf16.msra.mxu0 0
        %1205 = vmatprep.subr.bf16.mxu0 0
        %1206 = vmatpush1.bf16.msra.mxu0 0
        %1207 = vmatprep.subr.bf16.mxu0 0
        %1208 = vmatpush1.bf16.msra.mxu0 %v1189
        %1209 = vmatprep.subr.bf16.mxu0 0
        %1210 = vmatpush1.bf16.msra.mxu0 %v1188
        %1211 = vmatprep.subr.bf16.mxu0 0
        %1212 = vmatpush2.bf16.msra.mxu0 0
        %1213 = vmatprep.subr.bf16.mxu0 0
        %1214 = vmatpush2.bf16.msra.mxu0 0
        %1215 = vmatprep.subr.bf16.mxu0 0
        %1216 = vmatpush2.bf16.msra.mxu0 0
        %1217 = vmatprep.subr.bf16.mxu0 0
        %1218 = vmatpush2.bf16.msra.mxu0 0
        %1219 = vmatprep.subr.bf16.mxu0 0
        %1220 = vmatpush2.bf16.msra.mxu0 0
        %1221 = vmatprep.subr.bf16.mxu0 0
        %1222 = vmatpush2.bf16.msra.mxu0 0
        %1223 = vmatprep.subr.bf16.mxu0 0
        %1224 = vmatpush2.bf16.msra.mxu0 0
        %1225 = vmatprep.subr.bf16.mxu0 0
        %1226 = vmatpush2.bf16.msra.mxu0 0
        %1227 = vmatprep.mubr.bf16.mxu0 0
        %1228 = vmatmul.mubr.bf16.gmra.mxu0 %v1193
        %v1229 = vpop.f32.mrf.mxu0
        %v1230 = vadd.f32 %v1178, %v1229
        %v1231 = vpop.f32.mrf.mxu0
        %v1232 = vpop.f32.mrf.mxu0
        %v1233 = vadd.f32 %v1178, %v1232
        %v1234 = vpop.f32.mrf.mxu0
        %1235 = vdwg.mxu0
        %1236 = vst.msk [vmem:[%s452] sm:$0xff] %vm492, %v1230
        %1237 = vst.msk [vmem:[%s452 + $0x8] sm:$0xff] %vm492, %v1233
        %s1238 = sand.u32 %s221, 1
        %s1239 = scalar_lea.sflag [#allocation4], %s1238
        %s1240 = sand.u32 %s221, 1
        %s1241 = smul.addr %s1240, 16
        %s1242 = scalar_lea.vmem [#allocation14], %s1241
        // Predicated region
        $region81: #{tpu_custom_call.1} parent=51 // pred_check
          %p1243 = pneg %p231
        $region82: #{tpu_custom_call.1} parent=51 // pred_check_branch
          %1245 = sbr.rel (%p1243) target = $region84
        $region83: #{tpu_custom_call.1} parent=51 // pred_region
          %s1247 = ssub.s32 256, 256
          %1248 = vsyncadd %s1239, %s1247
          %s1249 = smul.addr %s30, 2
          %s1250 = smul.addr %s1249, 128
          %s1251 = scalar_lea.hbm %s8, %s1250
          %s1252 = sshll.u32 %s1242, 4
          %s1253 = int_to_ptr.vmem [resolvable:$true] %s1252
          %1258 = dma.vmem_to_hbm [thread:$0]  %s1253, 256, %s1251, %s1239, 128, 128, 8
        $region84: #{tpu_custom_call.1} parent=51 // pred_fallthru
          _
      $region52: #{tpu_custom_call.1} parent=5 // pred_fallthru
        _
      %p1259 = scmp.le.s32.totalorder 2, %s25
      // Predicated region
      $region85: #{tpu_custom_call.1} parent=5 // pred_check
        %p1260 = pneg %p1259
      $region86: #{tpu_custom_call.1} parent=5 // pred_check_branch
        %1262 = sbr.rel (%p1260) target = $region88
      $region87: #{tpu_custom_call.1} parent=5 // pred_region
        %s1263 = ssub.s32 %s25, 2
        // Predicated region
        $region89: #{tpu_custom_call.1} parent=87 // pred_check
          %p1264 = pneg %p237
        $region90: #{tpu_custom_call.1} parent=87 // pred_check_branch
          %1266 = sbr.rel (%p1264) target = $region92
        $region91: #{tpu_custom_call.1} parent=87 // pred_region
          %s1267 = sand.u32 %s222, 1
          %s1268 = scalar_lea.sflag [#allocation4], %s1267
          %s1269 = sand.u32 %s222, 1
          %s1270 = smul.addr %s1269, 16
          %s1271 = scalar_lea.vmem [#allocation14], %s1270
          %1272 = dma.done %s1268, 256
        $region92: #{tpu_custom_call.1} parent=87 // pred_fallthru
          _
      $region88: #{tpu_custom_call.1} parent=5 // pred_fallthru
        _
    $region6: #{tpu_custom_call.1} parent=1 // loop_footer
      %s29 = sadd.s32 1, %s25
    $region7: #{tpu_custom_call.1} parent=1 // loop_footer_branch
      %24 = sbr.rel target = $region3
    $region8: #{tpu_custom_call.1} parent=1 // loop_exit
      _
    %1273 = vsyncpa [#allocation3], 1
    %s1274 = scalar_lea.sflag [#allocation3], 1
    %1275 = vsyncpa %s1274, 1
    %1276 = vsyncpa [#allocation6], 1
    %s1277 = scalar_lea.sflag [#allocation6], 1
    %1278 = vsyncpa %s1277, 1
    %1279 = vsyncpa [#allocation9], 1
    %1280 = vsyncpa [#allocation12], 1
    %1281 = vsyncpa [#allocation4], 1
    %s1282 = scalar_lea.sflag [#allocation4], 1
    %1283 = vsyncpa %s1282, 1

</llo_original>
